<compile_context>
chip_gen: v7x
topology: tpu7x:2x2x1
jax: 0.10.0
libtpu: 0.0.40
codegen_flags: <defaults>
</compile_context>

<pallas_src>
import functools

import jax
import jax.numpy as jnp
import numpy as np
from jax.experimental import pallas as pl
from jax.experimental.pallas import tpu as pltpu

KERNEL_SIZE = 7
PAD = KERNEL_SIZE // 2
NUM_GROUPS = 16          # nn.GroupNorm(16, channel)
GN_EPS = 1e-5            # PyTorch GroupNorm default eps


def _ela_kernel(x_ref, pool_ref, exph_ref, expw_ref, wconv_ref, gamma_ref,
                beta_ref, gmat_ref, o_ref, *, h, w, cg):
    """One grid step: `batch_tile` images folded into the channel axis.

    x_ref    : (1, C, h*w)  native dtype (C = batch_tile * channels)
    pool_ref : (h*w, h+w)   mean-pool matrix (cols 0..h-1: mean over w,
                             cols h..h+w-1: mean over h)
    exph_ref : (h, h*w)     0/1 "repeat each row value w times" matrix
    expw_ref : (w, h*w)     0/1 "tile the column vector h times" matrix
    wconv_ref: (7, C, 1)    depthwise conv taps (per-tap leading-axis rows)
    gamma/beta: (C, 1)      GroupNorm affine
    gmat_ref : (C, C)       block-diagonal same-group indicator
    """
    x = x_ref[0]                                       # (C, HW) native dtype

    # Row/col means as one lane-dense MXU matmul: (C,HW) @ (HW, h+w).
    pooled = jnp.dot(x, pool_ref[...],
                     preferred_element_type=jnp.float32)        # (C, h+w) f32
    v_h = pooled[:, :h]                                # (C, h) mean over w
    v_w = pooled[:, h:]                                # (C, w) mean over h

    def dwconv(v):
        """Depthwise Conv1d(k=7, pad=3, groups=C, no bias): pad + 7 VPU FMAs."""
        C, L = v.shape
        zpad = jnp.zeros((C, PAD), jnp.float32)
        vp = jnp.concatenate([zpad, v, zpad], axis=1)  # (C, L + 2*PAD)
        y = jnp.zeros_like(v)
        for k in range(KERNEL_SIZE):                   # unrolled (static)
            y = y + wconv_ref[k] * vp[:, k:k + L]
        return y

    y_h = dwconv(v_h)                                  # (C, h)
    y_w = dwconv(v_w)                                  # (C, w)

    # GroupNorm stats of both branches fused into one (C,C)@(C,4) matmul.
    stats = jnp.concatenate(
        [jnp.sum(y_h, axis=-1, keepdims=True),
         jnp.sum(y_h * y_h, axis=-1, keepdims=True),
         jnp.sum(y_w, axis=-1, keepdims=True),
         jnp.sum(y_w * y_w, axis=-1, keepdims=True)], axis=-1)   # (C, 4)
    g = jnp.dot(gmat_ref[...], stats,
                preferred_element_type=jnp.float32)              # (C, 4)

    n_h = float(cg * h)
    n_w = float(cg * w)
    mean_h = g[:, 0:1] / n_h
    var_h = g[:, 1:2] / n_h - mean_h * mean_h          # biased var (PyTorch GN)
    mean_w = g[:, 2:3] / n_w
    var_w = g[:, 3:4] / n_w - mean_w * mean_w

    gamma = gamma_ref[...]
    beta = beta_ref[...]
    a_h = jax.nn.sigmoid((y_h - mean_h) * jax.lax.rsqrt(var_h + GN_EPS)
                         * gamma + beta)               # (C, h)
    a_w = jax.nn.sigmoid((y_w - mean_w) * jax.lax.rsqrt(var_w + GN_EPS)
                         * gamma + beta)               # (C, w)

    # Broadcast the attention vectors to the lane-dense (C, HW) layout on MXU.
    s_h = jnp.dot(a_h.astype(x.dtype), exph_ref[...],
                  preferred_element_type=jnp.float32)            # (C, HW)
    s_w = jnp.dot(a_w.astype(x.dtype), expw_ref[...],
                  preferred_element_type=jnp.float32)            # (C, HW)
    scale = (s_h * s_w).astype(x.dtype)
    o_ref[0] = x * scale


def _pool_expand_mats(h, w, dtype):
    hw = h * w
    rows = np.arange(hw) // w
    cols = np.arange(hw) % w
    exp_h = (np.arange(h)[:, None] == rows[None, :]).astype(np.float32)  # (h,hw)
    exp_w = (np.arange(w)[:, None] == cols[None, :]).astype(np.float32)  # (w,hw)
    pool = np.concatenate([exp_h.T / w, exp_w.T / h], axis=1)            # (hw,h+w)
    return (jnp.asarray(pool, dtype), jnp.asarray(exp_h, dtype),
            jnp.asarray(exp_w, dtype))


def _group_indicator(c_fold, cg):
    grp = np.arange(c_fold) // cg
    return jnp.asarray((grp[:, None] == grp[None, :]).astype(np.float32))


def _vmem_estimate(bt, c, h, w, itemsize):
    c_fold = bt * c
    hw = h * w
    blocks = 2 * 2 * c_fold * hw * itemsize            # in + out, double-buffered
    consts = 2 * 4 * (hw * (h + w) + (h + w) * hw + KERNEL_SIZE * c_fold
                      + 2 * c_fold + c_fold * c_fold)
    scratch = 4 * c_fold * hw * 4                      # f32 intermediates (rough)
    return blocks + consts + scratch


def _pick_batch_tile(b, c, h, w, itemsize, budget=24 << 20):
    best = 1
    for bt in range(1, b + 1):
        if b % bt == 0 and _vmem_estimate(bt, c, h, w, itemsize) <= budget:
            best = bt
    return best


def efficient_localization_attention(x, wconv, gamma, beta, *, batch_tile=None):
    """x: (b, c, h, w); wconv: (c, 7) depthwise taps; gamma/beta: (c,)."""
    b, c, h, w = x.shape
    assert c % NUM_GROUPS == 0, "GroupNorm(16, c) requires c % 16 == 0"
    cg = c // NUM_GROUPS
    hw = h * w
    itemsize = jnp.dtype(x.dtype).itemsize

    if batch_tile is None:
        batch_tile = _pick_batch_tile(b, c, h, w, itemsize)
    assert b % batch_tile == 0
    nb = b // batch_tile
    c_fold = batch_tile * c
    # TODO(synk): for very large c*h*w (v7x 64 MiB VMEM) add a channel-block
    # grid axis in multiples of c // NUM_GROUPS instead of whole-image blocks.

    # Fold images into the channel axis & flatten spatial dims (lane-dense).
    x_f = x.reshape(nb, c_fold, hw)

    pool, exp_h, exp_w = _pool_expand_mats(h, w, x.dtype)
    wconv_f = jnp.tile(wconv.astype(jnp.float32).T[:, :, None],
                       (1, batch_tile, 1))                       # (7, c_fold, 1)
    gamma_f = jnp.tile(gamma.reshape(c, 1).astype(jnp.float32), (batch_tile, 1))
    beta_f = jnp.tile(beta.reshape(c, 1).astype(jnp.float32), (batch_tile, 1))
    gmat = _group_indicator(c_fold, cg)

    vmem_limit = int(min(max(_vmem_estimate(batch_tile, c, h, w, itemsize)
                             + (8 << 20), 32 << 20), 48 << 20))

    kernel = functools.partial(_ela_kernel, h=h, w=w, cg=cg)

    out = pl.pallas_call(
        kernel,
        out_shape=jax.ShapeDtypeStruct((nb, c_fold, hw), x.dtype),
        grid_spec=pltpu.PrefetchScalarGridSpec(
            num_scalar_prefetch=0,
            grid=(nb,),
            in_specs=[
                pl.BlockSpec((1, c_fold, hw), lambda i: (i, 0, 0)),
                pl.BlockSpec((hw, h + w), lambda i: (0, 0)),
                pl.BlockSpec((h, hw), lambda i: (0, 0)),
                pl.BlockSpec((w, hw), lambda i: (0, 0)),
                pl.BlockSpec((KERNEL_SIZE, c_fold, 1), lambda i: (0, 0, 0)),
                pl.BlockSpec((c_fold, 1), lambda i: (0, 0)),
                pl.BlockSpec((c_fold, 1), lambda i: (0, 0)),
                pl.BlockSpec((c_fold, c_fold), lambda i: (0, 0)),
            ],
            out_specs=pl.BlockSpec((1, c_fold, hw), lambda i: (i, 0, 0)),
        ),
        compiler_params=pltpu.CompilerParams(
            dimension_semantics=("parallel",),
            vmem_limit_bytes=vmem_limit),
    )(x_f, pool, exp_h, exp_w, wconv_f, gamma_f, beta_f, gmat)

    return out.reshape(b, c, h, w)


def reference(x, wconv, gamma, beta):
    """Pure-JAX reference matching the PyTorch forward."""
    b, c, h, w = x.shape

    def branch(v):  # v: (b, c, L)
        L = v.shape[-1]
        y = jax.lax.conv_general_dilated(
            v, wconv[:, None, :], window_strides=(1,), padding=[(PAD, PAD)],
            dimension_numbers=('NCH', 'OIH', 'NCH'), feature_group_count=c)
        yg = y.reshape(b, NUM_GROUPS, c // NUM_GROUPS, L)
        mean = yg.mean(axis=(2, 3), keepdims=True)
        var = yg.var(axis=(2, 3), keepdims=True)
        yn = ((yg - mean) / jnp.sqrt(var + GN_EPS)).reshape(b, c, L)
        return jax.nn.sigmoid(yn * gamma[None, :, None] + beta[None, :, None])

    a_h = branch(x.mean(axis=3))                   # (b, c, h)
    a_w = branch(x.mean(axis=2))                   # (b, c, w)
    return x * a_h[:, :, :, None] * a_w[:, :, None, :]


if __name__ == "__main__":
    key = jax.random.PRNGKey(0)
    k1, k2, k3, k4 = jax.random.split(key, 4)

    b, c, h, w = 2, 32, 16, 16                     # channel must be divisible by 16
    x = jax.random.normal(k1, (b, c, h, w), jnp.float32)
    # Synthetic parameters (shapes from the module __init__):
    #   Conv1d(c, c, 7, padding=3, groups=c, bias=False) -> depthwise taps (c, 7)
    #   GroupNorm(16, c) -> gamma (c,), beta (c,)
    wconv = jax.random.normal(k2, (c, KERNEL_SIZE), jnp.float32) / KERNEL_SIZE
    gamma = 1.0 + 0.1 * jax.random.normal(k3, (c,), jnp.float32)
    beta = 0.1 * jax.random.normal(k4, (c,), jnp.float32)

    out = efficient_localization_attention(x, wconv, gamma, beta)
    out = jax.block_until_ready(out)

    ref = reference(x, wconv, gamma, beta)
    err = float(np.max(np.abs(np.asarray(out) - np.asarray(ref))))
    assert np.allclose(np.asarray(out), np.asarray(ref), atol=1e-4, rtol=1e-4), err
    print("KERNEL_OK")
</pallas_src>

<mosaic_0001>
module attributes {stable_mosaic.version = 11 : i64} {
  func.func @_ela_kernel(%arg0: i32, %arg1: memref<1x64x256xf32, #tpu.memory_space<vmem>>, %arg2: memref<256x32xf32, #tpu.memory_space<vmem>>, %arg3: memref<16x256xf32, #tpu.memory_space<vmem>>, %arg4: memref<16x256xf32, #tpu.memory_space<vmem>>, %arg5: memref<7x64x1xf32, #tpu.memory_space<vmem>>, %arg6: memref<64x1xf32, #tpu.memory_space<vmem>>, %arg7: memref<64x1xf32, #tpu.memory_space<vmem>>, %arg8: memref<64x64xf32, #tpu.memory_space<vmem>>, %arg9: memref<1x64x256xf32, #tpu.memory_space<vmem>>) attributes {dimension_semantics = [#tpu.dimension_semantics<parallel>], iteration_bounds = array<i64: 1>, scalar_prefetch = 0 : i64, scratch_operands = 0 : i64, tpu.core_type = #tpu.core_type<tc>, window_params = [{transform_indices = @transform_0, window_bounds = array<i64: 1, 64, 256>}, {pipeline_mode = #tpu.pipeline_mode<synchronous>, transform_indices = @transform_1, window_bounds = array<i64: 256, 32>}, {pipeline_mode = #tpu.pipeline_mode<synchronous>, transform_indices = @transform_2, window_bounds = array<i64: 16, 256>}, {pipeline_mode = #tpu.pipeline_mode<synchronous>, transform_indices = @transform_3, window_bounds = array<i64: 16, 256>}, {pipeline_mode = #tpu.pipeline_mode<synchronous>, transform_indices = @transform_4, window_bounds = array<i64: 7, 64, 1>}, {pipeline_mode = #tpu.pipeline_mode<synchronous>, transform_indices = @transform_5, window_bounds = array<i64: 64, 1>}, {pipeline_mode = #tpu.pipeline_mode<synchronous>, transform_indices = @transform_6, window_bounds = array<i64: 64, 1>}, {pipeline_mode = #tpu.pipeline_mode<synchronous>, transform_indices = @transform_7, window_bounds = array<i64: 64, 64>}, {transform_indices = @transform_8, window_bounds = array<i64: 1, 64, 256>}]} {
    %c0 = arith.constant 0 : index
    %c0_0 = arith.constant 0 : index
    %c0_1 = arith.constant 0 : index
    %0 = vector.load %arg1[%c0, %c0_0, %c0_1] : memref<1x64x256xf32, #tpu.memory_space<vmem>>, vector<1x64x256xf32>
    %1 = vector.shape_cast %0 : vector<1x64x256xf32> to vector<64x256xf32>
    %c0_2 = arith.constant 0 : index
    %c0_3 = arith.constant 0 : index
    %2 = vector.load %arg2[%c0_2, %c0_3] : memref<256x32xf32, #tpu.memory_space<vmem>>, vector<256x32xf32>
    %cst = arith.constant dense<0.000000e+00> : vector<64x32xf32>
    %3 = tpu.matmul %1, %2, %cst {dimension_numbers = #tpu.dot_dimension_numbers<[1], [0], [0], [1], [0, 0, 1, 1], [], []>} : vector<64x256xf32>, vector<256x32xf32>, vector<64x32xf32> -> vector<64x32xf32>
    %4 = vector.extract_strided_slice %3 {offsets = [0, 0], sizes = [64, 16], strides = [1, 1]} : vector<64x32xf32> to vector<64x16xf32>
    %5 = vector.extract_strided_slice %3 {offsets = [0, 16], sizes = [64, 16], strides = [1, 1]} : vector<64x32xf32> to vector<64x16xf32>
    %cst_4 = arith.constant 0.000000e+00 : f32
    %6 = vector.broadcast %cst_4 : f32 to vector<64x3xf32>
    %7 = tpu.concatenate %6, %4, %6 in 1 : vector<64x3xf32>, vector<64x16xf32>, vector<64x3xf32> -> vector<64x22xf32>
    %cst_5 = arith.constant 0.000000e+00 : f32
    %8 = vector.broadcast %cst_5 : f32 to vector<64x16xf32>
    %c0_6 = arith.constant 0 : index
    %c0_7 = arith.constant 0 : index
    %c0_8 = arith.constant 0 : index
    %9 = vector.load %arg5[%c0_6, %c0_7, %c0_8] : memref<7x64x1xf32, #tpu.memory_space<vmem>>, vector<1x64x1xf32>
    %10 = vector.shape_cast %9 : vector<1x64x1xf32> to vector<64x1xf32>
    %11 = vector.extract_strided_slice %7 {offsets = [0, 0], sizes = [64, 16], strides = [1, 1]} : vector<64x22xf32> to vector<64x16xf32>
    %12 = vector.broadcast %10 : vector<64x1xf32> to vector<64x16xf32>
    %13 = arith.mulf %12, %11 : vector<64x16xf32>
    %14 = arith.addf %8, %13 : vector<64x16xf32>
    %c1 = arith.constant 1 : index
    %c0_9 = arith.constant 0 : index
    %c0_10 = arith.constant 0 : index
    %15 = vector.load %arg5[%c1, %c0_9, %c0_10] : memref<7x64x1xf32, #tpu.memory_space<vmem>>, vector<1x64x1xf32>
    %16 = vector.shape_cast %15 : vector<1x64x1xf32> to vector<64x1xf32>
    %17 = vector.extract_strided_slice %7 {offsets = [0, 1], sizes = [64, 16], strides = [1, 1]} : vector<64x22xf32> to vector<64x16xf32>
    %18 = vector.broadcast %16 : vector<64x1xf32> to vector<64x16xf32>
    %19 = arith.mulf %18, %17 : vector<64x16xf32>
    %20 = arith.addf %14, %19 : vector<64x16xf32>
    %c2 = arith.constant 2 : index
    %c0_11 = arith.constant 0 : index
    %c0_12 = arith.constant 0 : index
    %21 = vector.load %arg5[%c2, %c0_11, %c0_12] : memref<7x64x1xf32, #tpu.memory_space<vmem>>, vector<1x64x1xf32>
    %22 = vector.shape_cast %21 : vector<1x64x1xf32> to vector<64x1xf32>
    %23 = vector.extract_strided_slice %7 {offsets = [0, 2], sizes = [64, 16], strides = [1, 1]} : vector<64x22xf32> to vector<64x16xf32>
    %24 = vector.broadcast %22 : vector<64x1xf32> to vector<64x16xf32>
    %25 = arith.mulf %24, %23 : vector<64x16xf32>
    %26 = arith.addf %20, %25 : vector<64x16xf32>
    %c3 = arith.constant 3 : index
    %c0_13 = arith.constant 0 : index
    %c0_14 = arith.constant 0 : index
    %27 = vector.load %arg5[%c3, %c0_13, %c0_14] : memref<7x64x1xf32, #tpu.memory_space<vmem>>, vector<1x64x1xf32>
    %28 = vector.shape_cast %27 : vector<1x64x1xf32> to vector<64x1xf32>
    %29 = vector.extract_strided_slice %7 {offsets = [0, 3], sizes = [64, 16], strides = [1, 1]} : vector<64x22xf32> to vector<64x16xf32>
    %30 = vector.broadcast %28 : vector<64x1xf32> to vector<64x16xf32>
    %31 = arith.mulf %30, %29 : vector<64x16xf32>
    %32 = arith.addf %26, %31 : vector<64x16xf32>
    %c4 = arith.constant 4 : index
    %c0_15 = arith.constant 0 : index
    %c0_16 = arith.constant 0 : index
    %33 = vector.load %arg5[%c4, %c0_15, %c0_16] : memref<7x64x1xf32, #tpu.memory_space<vmem>>, vector<1x64x1xf32>
    %34 = vector.shape_cast %33 : vector<1x64x1xf32> to vector<64x1xf32>
    %35 = vector.extract_strided_slice %7 {offsets = [0, 4], sizes = [64, 16], strides = [1, 1]} : vector<64x22xf32> to vector<64x16xf32>
    %36 = vector.broadcast %34 : vector<64x1xf32> to vector<64x16xf32>
    %37 = arith.mulf %36, %35 : vector<64x16xf32>
    %38 = arith.addf %32, %37 : vector<64x16xf32>
    %c5 = arith.constant 5 : index
    %c0_17 = arith.constant 0 : index
    %c0_18 = arith.constant 0 : index
    %39 = vector.load %arg5[%c5, %c0_17, %c0_18] : memref<7x64x1xf32, #tpu.memory_space<vmem>>, vector<1x64x1xf32>
    %40 = vector.shape_cast %39 : vector<1x64x1xf32> to vector<64x1xf32>
    %41 = vector.extract_strided_slice %7 {offsets = [0, 5], sizes = [64, 16], strides = [1, 1]} : vector<64x22xf32> to vector<64x16xf32>
    %42 = vector.broadcast %40 : vector<64x1xf32> to vector<64x16xf32>
    %43 = arith.mulf %42, %41 : vector<64x16xf32>
    %44 = arith.addf %38, %43 : vector<64x16xf32>
    %c6 = arith.constant 6 : index
    %c0_19 = arith.constant 0 : index
    %c0_20 = arith.constant 0 : index
    %45 = vector.load %arg5[%c6, %c0_19, %c0_20] : memref<7x64x1xf32, #tpu.memory_space<vmem>>, vector<1x64x1xf32>
    %46 = vector.shape_cast %45 : vector<1x64x1xf32> to vector<64x1xf32>
    %47 = vector.extract_strided_slice %7 {offsets = [0, 6], sizes = [64, 16], strides = [1, 1]} : vector<64x22xf32> to vector<64x16xf32>
    %48 = vector.broadcast %46 : vector<64x1xf32> to vector<64x16xf32>
    %49 = arith.mulf %48, %47 : vector<64x16xf32>
    %50 = arith.addf %44, %49 : vector<64x16xf32>
    %cst_21 = arith.constant 0.000000e+00 : f32
    %51 = vector.broadcast %cst_21 : f32 to vector<64x3xf32>
    %52 = tpu.concatenate %51, %5, %51 in 1 : vector<64x3xf32>, vector<64x16xf32>, vector<64x3xf32> -> vector<64x22xf32>
    %cst_22 = arith.constant 0.000000e+00 : f32
    %53 = vector.broadcast %cst_22 : f32 to vector<64x16xf32>
    %c0_23 = arith.constant 0 : index
    %c0_24 = arith.constant 0 : index
    %c0_25 = arith.constant 0 : index
    %54 = vector.load %arg5[%c0_23, %c0_24, %c0_25] : memref<7x64x1xf32, #tpu.memory_space<vmem>>, vector<1x64x1xf32>
    %55 = vector.shape_cast %54 : vector<1x64x1xf32> to vector<64x1xf32>
    %56 = vector.extract_strided_slice %52 {offsets = [0, 0], sizes = [64, 16], strides = [1, 1]} : vector<64x22xf32> to vector<64x16xf32>
    %57 = vector.broadcast %55 : vector<64x1xf32> to vector<64x16xf32>
    %58 = arith.mulf %57, %56 : vector<64x16xf32>
    %59 = arith.addf %53, %58 : vector<64x16xf32>
    %c1_26 = arith.constant 1 : index
    %c0_27 = arith.constant 0 : index
    %c0_28 = arith.constant 0 : index
    %60 = vector.load %arg5[%c1_26, %c0_27, %c0_28] : memref<7x64x1xf32, #tpu.memory_space<vmem>>, vector<1x64x1xf32>
    %61 = vector.shape_cast %60 : vector<1x64x1xf32> to vector<64x1xf32>
    %62 = vector.extract_strided_slice %52 {offsets = [0, 1], sizes = [64, 16], strides = [1, 1]} : vector<64x22xf32> to vector<64x16xf32>
    %63 = vector.broadcast %61 : vector<64x1xf32> to vector<64x16xf32>
    %64 = arith.mulf %63, %62 : vector<64x16xf32>
    %65 = arith.addf %59, %64 : vector<64x16xf32>
    %c2_29 = arith.constant 2 : index
    %c0_30 = arith.constant 0 : index
    %c0_31 = arith.constant 0 : index
    %66 = vector.load %arg5[%c2_29, %c0_30, %c0_31] : memref<7x64x1xf32, #tpu.memory_space<vmem>>, vector<1x64x1xf32>
    %67 = vector.shape_cast %66 : vector<1x64x1xf32> to vector<64x1xf32>
    %68 = vector.extract_strided_slice %52 {offsets = [0, 2], sizes = [64, 16], strides = [1, 1]} : vector<64x22xf32> to vector<64x16xf32>
    %69 = vector.broadcast %67 : vector<64x1xf32> to vector<64x16xf32>
    %70 = arith.mulf %69, %68 : vector<64x16xf32>
    %71 = arith.addf %65, %70 : vector<64x16xf32>
    %c3_32 = arith.constant 3 : index
    %c0_33 = arith.constant 0 : index
    %c0_34 = arith.constant 0 : index
    %72 = vector.load %arg5[%c3_32, %c0_33, %c0_34] : memref<7x64x1xf32, #tpu.memory_space<vmem>>, vector<1x64x1xf32>
    %73 = vector.shape_cast %72 : vector<1x64x1xf32> to vector<64x1xf32>
    %74 = vector.extract_strided_slice %52 {offsets = [0, 3], sizes = [64, 16], strides = [1, 1]} : vector<64x22xf32> to vector<64x16xf32>
    %75 = vector.broadcast %73 : vector<64x1xf32> to vector<64x16xf32>
    %76 = arith.mulf %75, %74 : vector<64x16xf32>
    %77 = arith.addf %71, %76 : vector<64x16xf32>
    %c4_35 = arith.constant 4 : index
    %c0_36 = arith.constant 0 : index
    %c0_37 = arith.constant 0 : index
    %78 = vector.load %arg5[%c4_35, %c0_36, %c0_37] : memref<7x64x1xf32, #tpu.memory_space<vmem>>, vector<1x64x1xf32>
    %79 = vector.shape_cast %78 : vector<1x64x1xf32> to vector<64x1xf32>
    %80 = vector.extract_strided_slice %52 {offsets = [0, 4], sizes = [64, 16], strides = [1, 1]} : vector<64x22xf32> to vector<64x16xf32>
    %81 = vector.broadcast %79 : vector<64x1xf32> to vector<64x16xf32>
    %82 = arith.mulf %81, %80 : vector<64x16xf32>
    %83 = arith.addf %77, %82 : vector<64x16xf32>
    %c5_38 = arith.constant 5 : index
    %c0_39 = arith.constant 0 : index
    %c0_40 = arith.constant 0 : index
    %84 = vector.load %arg5[%c5_38, %c0_39, %c0_40] : memref<7x64x1xf32, #tpu.memory_space<vmem>>, vector<1x64x1xf32>
    %85 = vector.shape_cast %84 : vector<1x64x1xf32> to vector<64x1xf32>
    %86 = vector.extract_strided_slice %52 {offsets = [0, 5], sizes = [64, 16], strides = [1, 1]} : vector<64x22xf32> to vector<64x16xf32>
    %87 = vector.broadcast %85 : vector<64x1xf32> to vector<64x16xf32>
    %88 = arith.mulf %87, %86 : vector<64x16xf32>
    %89 = arith.addf %83, %88 : vector<64x16xf32>
    %c6_41 = arith.constant 6 : index
    %c0_42 = arith.constant 0 : index
    %c0_43 = arith.constant 0 : index
    %90 = vector.load %arg5[%c6_41, %c0_42, %c0_43] : memref<7x64x1xf32, #tpu.memory_space<vmem>>, vector<1x64x1xf32>
    %91 = vector.shape_cast %90 : vector<1x64x1xf32> to vector<64x1xf32>
    %92 = vector.extract_strided_slice %52 {offsets = [0, 6], sizes = [64, 16], strides = [1, 1]} : vector<64x22xf32> to vector<64x16xf32>
    %93 = vector.broadcast %91 : vector<64x1xf32> to vector<64x16xf32>
    %94 = arith.mulf %93, %92 : vector<64x16xf32>
    %95 = arith.addf %89, %94 : vector<64x16xf32>
    %cst_44 = arith.constant dense<0.000000e+00> : vector<64xf32>
    %96 = vector.multi_reduction <add>, %50, %cst_44 [1] : vector<64x16xf32> to vector<64xf32>
    %97 = vector.shape_cast %96 : vector<64xf32> to vector<64x1xf32>
    %98 = arith.mulf %50, %50 : vector<64x16xf32>
    %cst_45 = arith.constant dense<0.000000e+00> : vector<64xf32>
    %99 = vector.multi_reduction <add>, %98, %cst_45 [1] : vector<64x16xf32> to vector<64xf32>
    %100 = vector.shape_cast %99 : vector<64xf32> to vector<64x1xf32>
    %cst_46 = arith.constant dense<0.000000e+00> : vector<64xf32>
    %101 = vector.multi_reduction <add>, %95, %cst_46 [1] : vector<64x16xf32> to vector<64xf32>
    %102 = vector.shape_cast %101 : vector<64xf32> to vector<64x1xf32>
    %103 = arith.mulf %95, %95 : vector<64x16xf32>
    %cst_47 = arith.constant dense<0.000000e+00> : vector<64xf32>
    %104 = vector.multi_reduction <add>, %103, %cst_47 [1] : vector<64x16xf32> to vector<64xf32>
    %105 = vector.shape_cast %104 : vector<64xf32> to vector<64x1xf32>
    %106 = tpu.concatenate %97, %100, %102, %105 in 1 : vector<64x1xf32>, vector<64x1xf32>, vector<64x1xf32>, vector<64x1xf32> -> vector<64x4xf32>
    %c0_48 = arith.constant 0 : index
    %c0_49 = arith.constant 0 : index
    %107 = vector.load %arg8[%c0_48, %c0_49] : memref<64x64xf32, #tpu.memory_space<vmem>>, vector<64x64xf32>
    %cst_50 = arith.constant dense<0.000000e+00> : vector<64x4xf32>
    %108 = tpu.matmul %107, %106, %cst_50 {dimension_numbers = #tpu.dot_dimension_numbers<[1], [0], [0], [1], [0, 0, 1, 1], [], []>} : vector<64x64xf32>, vector<64x4xf32>, vector<64x4xf32> -> vector<64x4xf32>
    %109 = vector.extract_strided_slice %108 {offsets = [0, 0], sizes = [64, 1], strides = [1, 1]} : vector<64x4xf32> to vector<64x1xf32>
    %cst_51 = arith.constant 3.200000e+01 : f32
    %110 = vector.broadcast %cst_51 : f32 to vector<64x1xf32>
    %111 = arith.divf %109, %110 : vector<64x1xf32>
    %112 = vector.extract_strided_slice %108 {offsets = [0, 1], sizes = [64, 1], strides = [1, 1]} : vector<64x4xf32> to vector<64x1xf32>
    %cst_52 = arith.constant 3.200000e+01 : f32
    %113 = vector.broadcast %cst_52 : f32 to vector<64x1xf32>
    %114 = arith.divf %112, %113 : vector<64x1xf32>
    %115 = arith.mulf %111, %111 : vector<64x1xf32>
    %116 = arith.subf %114, %115 : vector<64x1xf32>
    %117 = vector.extract_strided_slice %108 {offsets = [0, 2], sizes = [64, 1], strides = [1, 1]} : vector<64x4xf32> to vector<64x1xf32>
    %cst_53 = arith.constant 3.200000e+01 : f32
    %118 = vector.broadcast %cst_53 : f32 to vector<64x1xf32>
    %119 = arith.divf %117, %118 : vector<64x1xf32>
    %120 = vector.extract_strided_slice %108 {offsets = [0, 3], sizes = [64, 1], strides = [1, 1]} : vector<64x4xf32> to vector<64x1xf32>
    %cst_54 = arith.constant 3.200000e+01 : f32
    %121 = vector.broadcast %cst_54 : f32 to vector<64x1xf32>
    %122 = arith.divf %120, %121 : vector<64x1xf32>
    %123 = arith.mulf %119, %119 : vector<64x1xf32>
    %124 = arith.subf %122, %123 : vector<64x1xf32>
    %c0_55 = arith.constant 0 : index
    %c0_56 = arith.constant 0 : index
    %125 = vector.load %arg6[%c0_55, %c0_56] : memref<64x1xf32, #tpu.memory_space<vmem>>, vector<64x1xf32>
    %c0_57 = arith.constant 0 : index
    %c0_58 = arith.constant 0 : index
    %126 = vector.load %arg7[%c0_57, %c0_58] : memref<64x1xf32, #tpu.memory_space<vmem>>, vector<64x1xf32>
    %127 = vector.broadcast %111 : vector<64x1xf32> to vector<64x16xf32>
    %128 = arith.subf %50, %127 : vector<64x16xf32>
    %cst_59 = arith.constant 9.99999974E-6 : f32
    %129 = vector.broadcast %cst_59 : f32 to vector<64x1xf32>
    %130 = arith.addf %116, %129 : vector<64x1xf32>
    %131 = math.rsqrt %130 : vector<64x1xf32>
    %132 = vector.broadcast %131 : vector<64x1xf32> to vector<64x16xf32>
    %133 = arith.mulf %128, %132 : vector<64x16xf32>
    %134 = vector.broadcast %125 : vector<64x1xf32> to vector<64x16xf32>
    %135 = arith.mulf %133, %134 : vector<64x16xf32>
    %136 = vector.broadcast %126 : vector<64x1xf32> to vector<64x16xf32>
    %137 = arith.addf %135, %136 : vector<64x16xf32>
    %138 = arith.negf %137 : vector<64x16xf32>
    %139 = math.exp %138 : vector<64x16xf32>
    %cst_60 = arith.constant 1.000000e+00 : f32
    %140 = vector.broadcast %cst_60 : f32 to vector<64x16xf32>
    %141 = arith.addf %140, %139 : vector<64x16xf32>
    %142 = arith.divf %140, %141 : vector<64x16xf32>
    %143 = vector.broadcast %119 : vector<64x1xf32> to vector<64x16xf32>
    %144 = arith.subf %95, %143 : vector<64x16xf32>
    %cst_61 = arith.constant 9.99999974E-6 : f32
    %145 = vector.broadcast %cst_61 : f32 to vector<64x1xf32>
    %146 = arith.addf %124, %145 : vector<64x1xf32>
    %147 = math.rsqrt %146 : vector<64x1xf32>
    %148 = vector.broadcast %147 : vector<64x1xf32> to vector<64x16xf32>
    %149 = arith.mulf %144, %148 : vector<64x16xf32>
    %150 = vector.broadcast %125 : vector<64x1xf32> to vector<64x16xf32>
    %151 = arith.mulf %149, %150 : vector<64x16xf32>
    %152 = vector.broadcast %126 : vector<64x1xf32> to vector<64x16xf32>
    %153 = arith.addf %151, %152 : vector<64x16xf32>
    %154 = arith.negf %153 : vector<64x16xf32>
    %155 = math.exp %154 : vector<64x16xf32>
    %cst_62 = arith.constant 1.000000e+00 : f32
    %156 = vector.broadcast %cst_62 : f32 to vector<64x16xf32>
    %157 = arith.addf %156, %155 : vector<64x16xf32>
    %158 = arith.divf %156, %157 : vector<64x16xf32>
    %c0_63 = arith.constant 0 : index
    %c0_64 = arith.constant 0 : index
    %159 = vector.load %arg3[%c0_63, %c0_64] : memref<16x256xf32, #tpu.memory_space<vmem>>, vector<16x256xf32>
    %cst_65 = arith.constant dense<0.000000e+00> : vector<64x256xf32>
    %160 = tpu.matmul %142, %159, %cst_65 {dimension_numbers = #tpu.dot_dimension_numbers<[1], [0], [0], [1], [0, 0, 1, 1], [], []>} : vector<64x16xf32>, vector<16x256xf32>, vector<64x256xf32> -> vector<64x256xf32>
    %c0_66 = arith.constant 0 : index
    %c0_67 = arith.constant 0 : index
    %161 = vector.load %arg4[%c0_66, %c0_67] : memref<16x256xf32, #tpu.memory_space<vmem>>, vector<16x256xf32>
    %cst_68 = arith.constant dense<0.000000e+00> : vector<64x256xf32>
    %162 = tpu.matmul %158, %161, %cst_68 {dimension_numbers = #tpu.dot_dimension_numbers<[1], [0], [0], [1], [0, 0, 1, 1], [], []>} : vector<64x16xf32>, vector<16x256xf32>, vector<64x256xf32> -> vector<64x256xf32>
    %163 = arith.mulf %160, %162 : vector<64x256xf32>
    %164 = arith.mulf %1, %163 : vector<64x256xf32>
    %c0_69 = arith.constant 0 : index
    %c0_70 = arith.constant 0 : index
    %c0_71 = arith.constant 0 : index
    %165 = vector.load %arg9[%c0_69, %c0_70, %c0_71] : memref<1x64x256xf32, #tpu.memory_space<vmem>>, vector<1x64x256xf32>
    %166 = vector.shape_cast %165 : vector<1x64x256xf32> to vector<64x256xf32>
    %167 = vector.shape_cast %164 : vector<64x256xf32> to vector<1x64x256xf32>
    tpu.vector_store %arg9[%c0_69, %c0_70, %c0_71], %167 {strides = array<i32>} : memref<1x64x256xf32, #tpu.memory_space<vmem>>, vector<1x64x256xf32>,
    return
  }
  func.func @transform_0(%arg0: i32) -> (i32, i32, i32) {
    %c0_i32 = arith.constant 0 : i32
    %c0_i32_0 = arith.constant 0 : i32
    %c0_i32_1 = arith.constant 0 : i32
    return %arg0, %c0_i32, %c0_i32_0 : i32, i32, i32
  }
  func.func @transform_1(%arg0: i32) -> (i32, i32) {
    %c0_i32 = arith.constant 0 : i32
    %c0_i32_0 = arith.constant 0 : i32
    %c0_i32_1 = arith.constant 0 : i32
    return %c0_i32, %c0_i32_0 : i32, i32
  }
  func.func @transform_2(%arg0: i32) -> (i32, i32) {
    %c0_i32 = arith.constant 0 : i32
    %c0_i32_0 = arith.constant 0 : i32
    %c0_i32_1 = arith.constant 0 : i32
    return %c0_i32, %c0_i32_0 : i32, i32
  }
  func.func @transform_3(%arg0: i32) -> (i32, i32) {
    %c0_i32 = arith.constant 0 : i32
    %c0_i32_0 = arith.constant 0 : i32
    %c0_i32_1 = arith.constant 0 : i32
    return %c0_i32, %c0_i32_0 : i32, i32
  }
  func.func @transform_4(%arg0: i32) -> (i32, i32, i32) {
    %c0_i32 = arith.constant 0 : i32
    %c0_i32_0 = arith.constant 0 : i32
    %c0_i32_1 = arith.constant 0 : i32
    %c0_i32_2 = arith.constant 0 : i32
    return %c0_i32, %c0_i32_0, %c0_i32_1 : i32, i32, i32
  }
  func.func @transform_5(%arg0: i32) -> (i32, i32) {
    %c0_i32 = arith.constant 0 : i32
    %c0_i32_0 = arith.constant 0 : i32
    %c0_i32_1 = arith.constant 0 : i32
    return %c0_i32, %c0_i32_0 : i32, i32
  }
  func.func @transform_6(%arg0: i32) -> (i32, i32) {
    %c0_i32 = arith.constant 0 : i32
    %c0_i32_0 = arith.constant 0 : i32
    %c0_i32_1 = arith.constant 0 : i32
    return %c0_i32, %c0_i32_0 : i32, i32
  }
  func.func @transform_7(%arg0: i32) -> (i32, i32) {
    %c0_i32 = arith.constant 0 : i32
    %c0_i32_0 = arith.constant 0 : i32
    %c0_i32_1 = arith.constant 0 : i32
    return %c0_i32, %c0_i32_0 : i32, i32
  }
  func.func @transform_8(%arg0: i32) -> (i32, i32, i32) {
    %c0_i32 = arith.constant 0 : i32
    %c0_i32_0 = arith.constant 0 : i32
    %c0_i32_1 = arith.constant 0 : i32
    return %arg0, %c0_i32, %c0_i32_0 : i32, i32, i32
  }
}

</mosaic_0001>

<llo_original>
// kernel: tpu_custom_call.1
$region0: #{tpu_custom_call.1}
  #allocation0 [shape = 'u32[]', space=smem, size = 0x4, offset = 0x4, fixed_abs, tag = 'smem constant byte address 0x4 - core index']
  #allocation1 [shape = 'u32[144,128]{1,0:T(1,128)}', space=vmem, size = 0x12000, scoped, tag = 'internal scratch']
  %s0 = inlined_call_operand.vmem [shape: f32[1,64,256], index: 0, kind: input, shape index: {}]
  %s1 = inlined_call_operand.vmem [shape: f32[256,32], index: 1, kind: input, shape index: {}]
  %s2 = inlined_call_operand.vmem [shape: f32[16,256], index: 2, kind: input, shape index: {}]
  %s3 = inlined_call_operand.vmem [shape: f32[16,256], index: 3, kind: input, shape index: {}]
  %s4 = inlined_call_operand.vmem [shape: f32[7,64,1], index: 4, kind: input, shape index: {}]
  %s5 = inlined_call_operand.vmem [shape: f32[64,1], index: 5, kind: input, shape index: {}]
  %s6 = inlined_call_operand.vmem [shape: f32[64,1], index: 6, kind: input, shape index: {}]
  %s7 = inlined_call_operand.vmem [shape: f32[64,64], index: 7, kind: input, shape index: {}]
  %s8 = inlined_call_operand.hbm [shape: f32[1,64,256], index: 8, kind: output, shape index: {}]
  %s9 = sld [smem:[#allocation0]]
  $region42: #{tpu_custom_call.1} parent=0
    _
  %s11 = ssub.s32 1, %s9
  %s12 = scalar_select 0, %s11, %s9
  $region1: #{tpu_custom_call.1} parent=0
    #allocation2 [shape = 'u8[65536]{0}', space=vmem, size = 0x10000, scoped, tag = 'output window, operand 0, single buffered']
    #allocation3 [shape = 's32[1]{0}', space=sflag, size = 0x4, scoped, tag = 'scoped memory for tpu_custom_call.1']
    %13 = vsyncpa [#allocation3], 0
    // Predicated region
    $region2: #{tpu_custom_call.1} parent=1 // pred_check
      _
    $region3: #{tpu_custom_call.1} parent=1 // pred_check_branch
      %15 = sbr.rel (0) target = $region5
    $region4: #{tpu_custom_call.1} parent=1 // pred_region
      _
    $region5: #{tpu_custom_call.1} parent=1 // pred_fallthru
      _
    // Predicated region
    $region6: #{tpu_custom_call.1} parent=1 // pred_check
      _
    $region7: #{tpu_custom_call.1} parent=1 // pred_check_branch
      %17 = sbr.rel (0) target = $region9
    $region8: #{tpu_custom_call.1} parent=1 // pred_region
      _
    $region9: #{tpu_custom_call.1} parent=1 // pred_fallthru
      _
    // Predicated region
    $region10: #{tpu_custom_call.1} parent=1 // pred_check
      _
    $region11: #{tpu_custom_call.1} parent=1 // pred_check_branch
      %19 = sbr.rel (0) target = $region13
    $region12: #{tpu_custom_call.1} parent=1 // pred_region
      _
    $region13: #{tpu_custom_call.1} parent=1 // pred_fallthru
      _
    // Predicated region
    $region14: #{tpu_custom_call.1} parent=1 // pred_check
      _
    $region15: #{tpu_custom_call.1} parent=1 // pred_check_branch
      %21 = sbr.rel (0) target = $region17
    $region16: #{tpu_custom_call.1} parent=1 // pred_region
      _
    $region17: #{tpu_custom_call.1} parent=1 // pred_fallthru
      _
    // Predicated region
    $region18: #{tpu_custom_call.1} parent=1 // pred_check
      _
    $region19: #{tpu_custom_call.1} parent=1 // pred_check_branch
      %23 = sbr.rel (0) target = $region21
    $region20: #{tpu_custom_call.1} parent=1 // pred_region
      _
    $region21: #{tpu_custom_call.1} parent=1 // pred_fallthru
      _
    // Predicated region
    $region22: #{tpu_custom_call.1} parent=1 // pred_check
      _
    $region23: #{tpu_custom_call.1} parent=1 // pred_check_branch
      %25 = sbr.rel (0) target = $region25
    $region24: #{tpu_custom_call.1} parent=1 // pred_region
      _
    $region25: #{tpu_custom_call.1} parent=1 // pred_fallthru
      _
    // Predicated region
    $region26: #{tpu_custom_call.1} parent=1 // pred_check
      _
    $region27: #{tpu_custom_call.1} parent=1 // pred_check_branch
      %27 = sbr.rel (0) target = $region29
    $region28: #{tpu_custom_call.1} parent=1 // pred_region
      _
    $region29: #{tpu_custom_call.1} parent=1 // pred_fallthru
      _
    // Predicated region
    $region30: #{tpu_custom_call.1} parent=1 // pred_check
      _
    $region31: #{tpu_custom_call.1} parent=1 // pred_check_branch
      %29 = sbr.rel (0) target = $region33
    $region32: #{tpu_custom_call.1} parent=1 // pred_region
      _
    $region33: #{tpu_custom_call.1} parent=1 // pred_fallthru
      _
    %v30 = vld [vmem:[%s0] sm:$0xff]
    %v31 = vld [vmem:[%s0 + $0x8] sm:$0xff]
    %v32 = vld [vmem:[%s0 + $0x10] sm:$0xff]
    %v33 = vld [vmem:[%s0 + $0x18] sm:$0xff]
    %v34 = vld [vmem:[%s0 + $0x20] sm:$0xff]
    %v35 = vld [vmem:[%s0 + $0x28] sm:$0xff]
    %v36 = vld [vmem:[%s0 + $0x30] sm:$0xff]
    %v37 = vld [vmem:[%s0 + $0x38] sm:$0xff]
    %v38 = vld [vmem:[%s0 + $0x40] sm:$0xff]
    %v39 = vld [vmem:[%s0 + $0x48] sm:$0xff]
    %v40 = vld [vmem:[%s0 + $0x50] sm:$0xff]
    %v41 = vld [vmem:[%s0 + $0x58] sm:$0xff]
    %v42 = vld [vmem:[%s0 + $0x60] sm:$0xff]
    %v43 = vld [vmem:[%s0 + $0x68] sm:$0xff]
    %v44 = vld [vmem:[%s0 + $0x70] sm:$0xff]
    %v45 = vld [vmem:[%s0 + $0x78] sm:$0xff]
    %v46 = vld [vmem:[%s1] sm:$0xff]
    %v47 = vld [vmem:[%s1 + $0x8] sm:$0xff]
    %v48 = vld [vmem:[%s1 + $0x10] sm:$0xff]
    %v49 = vld [vmem:[%s1 + $0x18] sm:$0xff]
    %v50 = vld [vmem:[%s1 + $0x20] sm:$0xff]
    %v51 = vld [vmem:[%s1 + $0x28] sm:$0xff]
    %v52 = vld [vmem:[%s1 + $0x30] sm:$0xff]
    %v53 = vld [vmem:[%s1 + $0x38] sm:$0xff]
    %v54 = vld [vmem:[%s1 + $0x40] sm:$0xff]
    %v55 = vld [vmem:[%s1 + $0x48] sm:$0xff]
    %v56 = vld [vmem:[%s1 + $0x50] sm:$0xff]
    %v57 = vld [vmem:[%s1 + $0x58] sm:$0xff]
    %v58 = vld [vmem:[%s1 + $0x60] sm:$0xff]
    %v59 = vld [vmem:[%s1 + $0x68] sm:$0xff]
    %v60 = vld [vmem:[%s1 + $0x70] sm:$0xff]
    %v61 = vld [vmem:[%s1 + $0x78] sm:$0xff]
    %v62 = vld [vmem:[%s1 + $0x80] sm:$0xff]
    %v63 = vld [vmem:[%s1 + $0x88] sm:$0xff]
    %v64 = vld [vmem:[%s1 + $0x90] sm:$0xff]
    %v65 = vld [vmem:[%s1 + $0x98] sm:$0xff]
    %v66 = vld [vmem:[%s1 + $0xa0] sm:$0xff]
    %v67 = vld [vmem:[%s1 + $0xa8] sm:$0xff]
    %v68 = vld [vmem:[%s1 + $0xb0] sm:$0xff]
    %v69 = vld [vmem:[%s1 + $0xb8] sm:$0xff]
    %v70 = vld [vmem:[%s1 + $0xc0] sm:$0xff]
    %v71 = vld [vmem:[%s1 + $0xc8] sm:$0xff]
    %v72 = vld [vmem:[%s1 + $0xd0] sm:$0xff]
    %v73 = vld [vmem:[%s1 + $0xd8] sm:$0xff]
    %v74 = vld [vmem:[%s1 + $0xe0] sm:$0xff]
    %v75 = vld [vmem:[%s1 + $0xe8] sm:$0xff]
    %v76 = vld [vmem:[%s1 + $0xf0] sm:$0xff]
    %v77 = vld [vmem:[%s1 + $0xf8] sm:$0xff]
    %78 = vmatprep.subr.mxu0 0.0
    %79 = vmatpush1.msra.mxu0 %v46
    %80 = vmatprep.subr.mxu0 0.0
    %81 = vmatpush1.msra.mxu0 %v47
    %82 = vmatprep.subr.mxu0 0.0
    %83 = vmatpush1.msra.mxu0 %v48
    %84 = vmatprep.subr.mxu0 0.0
    %85 = vmatpush1.msra.mxu0 %v49
    %86 = vmatprep.subr.mxu0 0.0
    %87 = vmatpush1.msra.mxu0 %v50
    %88 = vmatprep.subr.mxu0 0.0
    %89 = vmatpush1.msra.mxu0 %v51
    %90 = vmatprep.subr.mxu0 0.0
    %91 = vmatpush1.msra.mxu0 %v52
    %92 = vmatprep.subr.mxu0 0.0
    %93 = vmatpush1.msra.mxu0 %v53
    %94 = vmatprep.subr.mxu0 0.0
    %95 = vmatpush1.msra.mxu0 %v54
    %96 = vmatprep.subr.mxu0 0.0
    %97 = vmatpush1.msra.mxu0 %v55
    %98 = vmatprep.subr.mxu0 0.0
    %99 = vmatpush1.msra.mxu0 %v56
    %100 = vmatprep.subr.mxu0 0.0
    %101 = vmatpush1.msra.mxu0 %v57
    %102 = vmatprep.subr.mxu0 0.0
    %103 = vmatpush1.msra.mxu0 %v58
    %104 = vmatprep.subr.mxu0 0.0
    %105 = vmatpush1.msra.mxu0 %v59
    %106 = vmatprep.subr.mxu0 0.0
    %107 = vmatpush1.msra.mxu0 %v60
    %108 = vmatprep.subr.mxu0 0.0
    %109 = vmatpush1.msra.mxu0 %v61
    %110 = vmatprep.subr.mxu0 0.0
    %111 = vmatpush1.msra.mxu0 %v62
    %112 = vmatprep.subr.mxu0 0.0
    %113 = vmatpush1.msra.mxu0 %v63
    %114 = vmatprep.subr.mxu0 0.0
    %115 = vmatpush1.msra.mxu0 %v64
    %116 = vmatprep.subr.mxu0 0.0
    %117 = vmatpush1.msra.mxu0 %v65
    %118 = vmatprep.subr.mxu0 0.0
    %119 = vmatpush1.msra.mxu0 %v66
    %120 = vmatprep.subr.mxu0 0.0
    %121 = vmatpush1.msra.mxu0 %v67
    %122 = vmatprep.subr.mxu0 0.0
    %123 = vmatpush1.msra.mxu0 %v68
    %124 = vmatprep.subr.mxu0 0.0
    %125 = vmatpush1.msra.mxu0 %v69
    %126 = vmatprep.subr.mxu0 0.0
    %127 = vmatpush1.msra.mxu0 %v70
    %128 = vmatprep.subr.mxu0 0.0
    %129 = vmatpush1.msra.mxu0 %v71
    %130 = vmatprep.subr.mxu0 0.0
    %131 = vmatpush1.msra.mxu0 %v72
    %132 = vmatprep.subr.mxu0 0.0
    %133 = vmatpush1.msra.mxu0 %v73
    %134 = vmatprep.subr.mxu0 0.0
    %135 = vmatpush1.msra.mxu0 %v74
    %136 = vmatprep.subr.mxu0 0.0
    %137 = vmatpush1.msra.mxu0 %v75
    %138 = vmatprep.subr.mxu0 0.0
    %139 = vmatpush1.msra.mxu0 %v76
    %140 = vmatprep.subr.mxu0 0.0
    %141 = vmatpush1.msra.mxu0 %v77
    %142 = vmatprep.mubr.f32.mxu0 %v31
    %143 = vmatmul.mubr.f32.gmra.mrb[0].mxu0 %v30
    %v144 = vpop.f32.mrb[0].mxu0
    %v145 = vadd.f32 0.0, %v144
    %v146 = vpop.f32.mrb[0].mxu0
    %147 = vmatprep.mubr.f32.mxu0 %v33
    %148 = vmatmul.mubr.f32.gmra.mrb[0].mxu0 %v32
    %v149 = vpop.f32.mrb[0].mxu0
    %v150 = vadd.f32 0.0, %v149
    %v151 = vpop.f32.mrb[0].mxu0
    %152 = vmatprep.mubr.f32.mxu0 %v35
    %153 = vmatmul.mubr.f32.gmra.mrb[0].mxu0 %v34
    %v154 = vpop.f32.mrb[0].mxu0
    %v155 = vadd.f32 0.0, %v154
    %v156 = vpop.f32.mrb[0].mxu0
    %157 = vmatprep.mubr.f32.mxu0 %v37
    %158 = vmatmul.mubr.f32.gmra.mrb[0].mxu0 %v36
    %v159 = vpop.f32.mrb[0].mxu0
    %v160 = vadd.f32 0.0, %v159
    %v161 = vpop.f32.mrb[0].mxu0
    %162 = vmatprep.mubr.f32.mxu0 %v39
    %163 = vmatmul.mubr.f32.gmra.mrb[0].mxu0 %v38
    %v164 = vpop.f32.mrb[0].mxu0
    %v165 = vadd.f32 0.0, %v164
    %v166 = vpop.f32.mrb[0].mxu0
    %167 = vmatprep.mubr.f32.mxu0 %v41
    %168 = vmatmul.mubr.f32.gmra.mrb[0].mxu0 %v40
    %v169 = vpop.f32.mrb[0].mxu0
    %v170 = vadd.f32 0.0, %v169
    %v171 = vpop.f32.mrb[0].mxu0
    %172 = vmatprep.mubr.f32.mxu0 %v43
    %173 = vmatmul.mubr.f32.gmra.mrb[0].mxu0 %v42
    %v174 = vpop.f32.mrb[0].mxu0
    %v175 = vadd.f32 0.0, %v174
    %v176 = vpop.f32.mrb[0].mxu0
    %177 = vmatprep.mubr.f32.mxu0 %v45
    %178 = vmatmul.mubr.f32.gmra.mrb[0].mxu0 %v44
    %v179 = vpop.f32.mrb[0].mxu0
    %v180 = vadd.f32 0.0, %v179
    %v181 = vpop.f32.mrb[0].mxu0
    %182 = vdwg.mxu0
    %191 = vrot.lane.b32.xlu0 %v145, 3
    %v192 = vpop.permute.xlu0 %191
    %193 = vrot.lane.b32.xlu0 %v150, 3
    %v194 = vpop.permute.xlu0 %193
    %195 = vrot.lane.b32.xlu0 %v155, 3
    %v196 = vpop.permute.xlu0 %195
    %197 = vrot.lane.b32.xlu0 %v160, 3
    %v198 = vpop.permute.xlu0 %197
    %199 = vrot.lane.b32.xlu0 %v165, 3
    %v200 = vpop.permute.xlu0 %199
    %201 = vrot.lane.b32.xlu0 %v170, 3
    %v202 = vpop.permute.xlu0 %201
    %203 = vrot.lane.b32.xlu0 %v175, 3
    %v204 = vpop.permute.xlu0 %203
    %205 = vrot.lane.b32.xlu0 %v180, 3
    %v206 = vpop.permute.xlu0 %205
    %vm215 = vcmask 23552
    %v216 = vsel %vm215, 0.0, %v192
    %v217 = vsel %vm215, 0.0, %v194
    %v218 = vsel %vm215, 0.0, %v196
    %v219 = vsel %vm215, 0.0, %v198
    %v220 = vsel %vm215, 0.0, %v200
    %v221 = vsel %vm215, 0.0, %v202
    %v222 = vsel %vm215, 0.0, %v204
    %v223 = vsel %vm215, 0.0, %v206
    %vm224 = vcmask 154624
    %v225 = vsel %vm224, %v216, 0.0
    %v226 = vsel %vm224, %v217, 0.0
    %v227 = vsel %vm224, %v218, 0.0
    %v228 = vsel %vm224, %v219, 0.0
    %v229 = vsel %vm224, %v220, 0.0
    %v230 = vsel %vm224, %v221, 0.0
    %v231 = vsel %vm224, %v222, 0.0
    %v232 = vsel %vm224, %v223, 0.0
    %v233 = vld [vmem:[%s4] sm:$0xff]
    %v234 = vld [vmem:[%s4 + $0x8] sm:$0xff]
    %v235 = vld [vmem:[%s4 + $0x10] sm:$0xff]
    %v236 = vld [vmem:[%s4 + $0x18] sm:$0xff]
    %v237 = vld [vmem:[%s4 + $0x20] sm:$0xff]
    %v238 = vld [vmem:[%s4 + $0x28] sm:$0xff]
    %v239 = vld [vmem:[%s4 + $0x30] sm:$0xff]
    %v240 = vld [vmem:[%s4 + $0x38] sm:$0xff]
    %242 = vset.pattern.permute.xlu0 0
    %243 = vperm.xlu0 %242, %v233
    %v244 = vpop.permute.xlu0 %243
    %247 = vset.pattern.permute.xlu0 0
    %248 = vperm.xlu0 %247, %v234
    %v249 = vpop.permute.xlu0 %248
    %252 = vset.pattern.permute.xlu0 0
    %253 = vperm.xlu0 %252, %v235
    %v254 = vpop.permute.xlu0 %253
    %257 = vset.pattern.permute.xlu0 0
    %258 = vperm.xlu0 %257, %v236
    %v259 = vpop.permute.xlu0 %258
    %262 = vset.pattern.permute.xlu0 0
    %263 = vperm.xlu0 %262, %v237
    %v264 = vpop.permute.xlu0 %263
    %267 = vset.pattern.permute.xlu0 0
    %268 = vperm.xlu0 %267, %v238
    %v269 = vpop.permute.xlu0 %268
    %272 = vset.pattern.permute.xlu0 0
    %273 = vperm.xlu0 %272, %v239
    %v274 = vpop.permute.xlu0 %273
    %277 = vset.pattern.permute.xlu0 0
    %278 = vperm.xlu0 %277, %v240
    %v279 = vpop.permute.xlu0 %278
    %v281 = vmul.f32 %v244, %v225
    %v282 = vmul.f32 %v249, %v226
    %v283 = vmul.f32 %v254, %v227
    %v284 = vmul.f32 %v259, %v228
    %v285 = vmul.f32 %v264, %v229
    %v286 = vmul.f32 %v269, %v230
    %v287 = vmul.f32 %v274, %v231
    %v288 = vmul.f32 %v279, %v232
    %v289 = vadd.f32 %v281, 0.0
    %v290 = vadd.f32 %v282, 0.0
    %v291 = vadd.f32 %v283, 0.0
    %v292 = vadd.f32 %v284, 0.0
    %v293 = vadd.f32 %v285, 0.0
    %v294 = vadd.f32 %v286, 0.0
    %v295 = vadd.f32 %v287, 0.0
    %v296 = vadd.f32 %v288, 0.0
    %s297 = scalar_lea.vmem %s4, 64
    %v298 = vld [vmem:[%s297] sm:$0xff]
    %v299 = vld [vmem:[%s297 + $0x8] sm:$0xff]
    %v300 = vld [vmem:[%s297 + $0x10] sm:$0xff]
    %v301 = vld [vmem:[%s297 + $0x18] sm:$0xff]
    %v302 = vld [vmem:[%s297 + $0x20] sm:$0xff]
    %v303 = vld [vmem:[%s297 + $0x28] sm:$0xff]
    %v304 = vld [vmem:[%s297 + $0x30] sm:$0xff]
    %v305 = vld [vmem:[%s297 + $0x38] sm:$0xff]
    %307 = vset.pattern.permute.xlu0 0
    %308 = vperm.xlu0 %307, %v298
    %v309 = vpop.permute.xlu0 %308
    %312 = vset.pattern.permute.xlu0 0
    %313 = vperm.xlu0 %312, %v299
    %v314 = vpop.permute.xlu0 %313
    %317 = vset.pattern.permute.xlu0 0
    %318 = vperm.xlu0 %317, %v300
    %v319 = vpop.permute.xlu0 %318
    %322 = vset.pattern.permute.xlu0 0
    %323 = vperm.xlu0 %322, %v301
    %v324 = vpop.permute.xlu0 %323
    %327 = vset.pattern.permute.xlu0 0
    %328 = vperm.xlu0 %327, %v302
    %v329 = vpop.permute.xlu0 %328
    %332 = vset.pattern.permute.xlu0 0
    %333 = vperm.xlu0 %332, %v303
    %v334 = vpop.permute.xlu0 %333
    %337 = vset.pattern.permute.xlu0 0
    %338 = vperm.xlu0 %337, %v304
    %v339 = vpop.permute.xlu0 %338
    %342 = vset.pattern.permute.xlu0 0
    %343 = vperm.xlu0 %342, %v305
    %v344 = vpop.permute.xlu0 %343
    %v346 = vmul.f32 %v309, %v225
    %v347 = vmul.f32 %v314, %v226
    %v348 = vmul.f32 %v319, %v227
    %v349 = vmul.f32 %v324, %v228
    %v350 = vmul.f32 %v329, %v229
    %v351 = vmul.f32 %v334, %v230
    %v352 = vmul.f32 %v339, %v231
    %v353 = vmul.f32 %v344, %v232
    %362 = vrot.lane.b32.xlu0 %v346, 127
    %v363 = vpop.permute.xlu0 %362
    %364 = vrot.lane.b32.xlu0 %v347, 127
    %v365 = vpop.permute.xlu0 %364
    %366 = vrot.lane.b32.xlu0 %v348, 127
    %v367 = vpop.permute.xlu0 %366
    %368 = vrot.lane.b32.xlu0 %v349, 127
    %v369 = vpop.permute.xlu0 %368
    %370 = vrot.lane.b32.xlu0 %v350, 127
    %v371 = vpop.permute.xlu0 %370
    %372 = vrot.lane.b32.xlu0 %v351, 127
    %v373 = vpop.permute.xlu0 %372
    %374 = vrot.lane.b32.xlu0 %v352, 127
    %v375 = vpop.permute.xlu0 %374
    %376 = vrot.lane.b32.xlu0 %v353, 127
    %v377 = vpop.permute.xlu0 %376
    %v386 = vadd.f32 %v289, %v363
    %v387 = vadd.f32 %v290, %v365
    %v388 = vadd.f32 %v291, %v367
    %v389 = vadd.f32 %v292, %v369
    %v390 = vadd.f32 %v293, %v371
    %v391 = vadd.f32 %v294, %v373
    %v392 = vadd.f32 %v295, %v375
    %v393 = vadd.f32 %v296, %v377
    %s394 = scalar_lea.vmem %s4, 128
    %v395 = vld [vmem:[%s394] sm:$0xff]
    %v396 = vld [vmem:[%s394 + $0x8] sm:$0xff]
    %v397 = vld [vmem:[%s394 + $0x10] sm:$0xff]
    %v398 = vld [vmem:[%s394 + $0x18] sm:$0xff]
    %v399 = vld [vmem:[%s394 + $0x20] sm:$0xff]
    %v400 = vld [vmem:[%s394 + $0x28] sm:$0xff]
    %v401 = vld [vmem:[%s394 + $0x30] sm:$0xff]
    %v402 = vld [vmem:[%s394 + $0x38] sm:$0xff]
    %404 = vset.pattern.permute.xlu0 0
    %405 = vperm.xlu0 %404, %v395
    %v406 = vpop.permute.xlu0 %405
    %409 = vset.pattern.permute.xlu0 0
    %410 = vperm.xlu0 %409, %v396
    %v411 = vpop.permute.xlu0 %410
    %414 = vset.pattern.permute.xlu0 0
    %415 = vperm.xlu0 %414, %v397
    %v416 = vpop.permute.xlu0 %415
    %419 = vset.pattern.permute.xlu0 0
    %420 = vperm.xlu0 %419, %v398
    %v421 = vpop.permute.xlu0 %420
    %424 = vset.pattern.permute.xlu0 0
    %425 = vperm.xlu0 %424, %v399
    %v426 = vpop.permute.xlu0 %425
    %429 = vset.pattern.permute.xlu0 0
    %430 = vperm.xlu0 %429, %v400
    %v431 = vpop.permute.xlu0 %430
    %434 = vset.pattern.permute.xlu0 0
    %435 = vperm.xlu0 %434, %v401
    %v436 = vpop.permute.xlu0 %435
    %439 = vset.pattern.permute.xlu0 0
    %440 = vperm.xlu0 %439, %v402
    %v441 = vpop.permute.xlu0 %440
    %v443 = vmul.f32 %v406, %v225
    %v444 = vmul.f32 %v411, %v226
    %v445 = vmul.f32 %v416, %v227
    %v446 = vmul.f32 %v421, %v228
    %v447 = vmul.f32 %v426, %v229
    %v448 = vmul.f32 %v431, %v230
    %v449 = vmul.f32 %v436, %v231
    %v450 = vmul.f32 %v441, %v232
    %459 = vrot.lane.b32.xlu0 %v443, 126
    %v460 = vpop.permute.xlu0 %459
    %461 = vrot.lane.b32.xlu0 %v444, 126
    %v462 = vpop.permute.xlu0 %461
    %463 = vrot.lane.b32.xlu0 %v445, 126
    %v464 = vpop.permute.xlu0 %463
    %465 = vrot.lane.b32.xlu0 %v446, 126
    %v466 = vpop.permute.xlu0 %465
    %467 = vrot.lane.b32.xlu0 %v447, 126
    %v468 = vpop.permute.xlu0 %467
    %469 = vrot.lane.b32.xlu0 %v448, 126
    %v470 = vpop.permute.xlu0 %469
    %471 = vrot.lane.b32.xlu0 %v449, 126
    %v472 = vpop.permute.xlu0 %471
    %473 = vrot.lane.b32.xlu0 %v450, 126
    %v474 = vpop.permute.xlu0 %473
    %v483 = vadd.f32 %v386, %v460
    %v484 = vadd.f32 %v387, %v462
    %v485 = vadd.f32 %v388, %v464
    %v486 = vadd.f32 %v389, %v466
    %v487 = vadd.f32 %v390, %v468
    %v488 = vadd.f32 %v391, %v470
    %v489 = vadd.f32 %v392, %v472
    %v490 = vadd.f32 %v393, %v474
    %s491 = scalar_lea.vmem %s4, 192
    %v492 = vld [vmem:[%s491] sm:$0xff]
    %v493 = vld [vmem:[%s491 + $0x8] sm:$0xff]
    %v494 = vld [vmem:[%s491 + $0x10] sm:$0xff]
    %v495 = vld [vmem:[%s491 + $0x18] sm:$0xff]
    %v496 = vld [vmem:[%s491 + $0x20] sm:$0xff]
    %v497 = vld [vmem:[%s491 + $0x28] sm:$0xff]
    %v498 = vld [vmem:[%s491 + $0x30] sm:$0xff]
    %v499 = vld [vmem:[%s491 + $0x38] sm:$0xff]
    %501 = vset.pattern.permute.xlu0 0
    %502 = vperm.xlu0 %501, %v492
    %v503 = vpop.permute.xlu0 %502
    %506 = vset.pattern.permute.xlu0 0
    %507 = vperm.xlu0 %506, %v493
    %v508 = vpop.permute.xlu0 %507
    %511 = vset.pattern.permute.xlu0 0
    %512 = vperm.xlu0 %511, %v494
    %v513 = vpop.permute.xlu0 %512
    %516 = vset.pattern.permute.xlu0 0
    %517 = vperm.xlu0 %516, %v495
    %v518 = vpop.permute.xlu0 %517
    %521 = vset.pattern.permute.xlu0 0
    %522 = vperm.xlu0 %521, %v496
    %v523 = vpop.permute.xlu0 %522
    %526 = vset.pattern.permute.xlu0 0
    %527 = vperm.xlu0 %526, %v497
    %v528 = vpop.permute.xlu0 %527
    %531 = vset.pattern.permute.xlu0 0
    %532 = vperm.xlu0 %531, %v498
    %v533 = vpop.permute.xlu0 %532
    %536 = vset.pattern.permute.xlu0 0
    %537 = vperm.xlu0 %536, %v499
    %v538 = vpop.permute.xlu0 %537
    %v540 = vmul.f32 %v503, %v225
    %v541 = vmul.f32 %v508, %v226
    %v542 = vmul.f32 %v513, %v227
    %v543 = vmul.f32 %v518, %v228
    %v544 = vmul.f32 %v523, %v229
    %v545 = vmul.f32 %v528, %v230
    %v546 = vmul.f32 %v533, %v231
    %v547 = vmul.f32 %v538, %v232
    %556 = vrot.lane.b32.xlu0 %v540, 125
    %v557 = vpop.permute.xlu0 %556
    %558 = vrot.lane.b32.xlu0 %v541, 125
    %v559 = vpop.permute.xlu0 %558
    %560 = vrot.lane.b32.xlu0 %v542, 125
    %v561 = vpop.permute.xlu0 %560
    %562 = vrot.lane.b32.xlu0 %v543, 125
    %v563 = vpop.permute.xlu0 %562
    %564 = vrot.lane.b32.xlu0 %v544, 125
    %v565 = vpop.permute.xlu0 %564
    %566 = vrot.lane.b32.xlu0 %v545, 125
    %v567 = vpop.permute.xlu0 %566
    %568 = vrot.lane.b32.xlu0 %v546, 125
    %v569 = vpop.permute.xlu0 %568
    %570 = vrot.lane.b32.xlu0 %v547, 125
    %v571 = vpop.permute.xlu0 %570
    %v580 = vadd.f32 %v483, %v557
    %v581 = vadd.f32 %v484, %v559
    %v582 = vadd.f32 %v485, %v561
    %v583 = vadd.f32 %v486, %v563
    %v584 = vadd.f32 %v487, %v565
    %v585 = vadd.f32 %v488, %v567
    %v586 = vadd.f32 %v489, %v569
    %v587 = vadd.f32 %v490, %v571
    %s588 = scalar_lea.vmem %s4, 256
    %v589 = vld [vmem:[%s588] sm:$0xff]
    %v590 = vld [vmem:[%s588 + $0x8] sm:$0xff]
    %v591 = vld [vmem:[%s588 + $0x10] sm:$0xff]
    %v592 = vld [vmem:[%s588 + $0x18] sm:$0xff]
    %v593 = vld [vmem:[%s588 + $0x20] sm:$0xff]
    %v594 = vld [vmem:[%s588 + $0x28] sm:$0xff]
    %v595 = vld [vmem:[%s588 + $0x30] sm:$0xff]
    %v596 = vld [vmem:[%s588 + $0x38] sm:$0xff]
    %598 = vset.pattern.permute.xlu0 0
    %599 = vperm.xlu0 %598, %v589
    %v600 = vpop.permute.xlu0 %599
    %603 = vset.pattern.permute.xlu0 0
    %604 = vperm.xlu0 %603, %v590
    %v605 = vpop.permute.xlu0 %604
    %608 = vset.pattern.permute.xlu0 0
    %609 = vperm.xlu0 %608, %v591
    %v610 = vpop.permute.xlu0 %609
    %613 = vset.pattern.permute.xlu0 0
    %614 = vperm.xlu0 %613, %v592
    %v615 = vpop.permute.xlu0 %614
    %618 = vset.pattern.permute.xlu0 0
    %619 = vperm.xlu0 %618, %v593
    %v620 = vpop.permute.xlu0 %619
    %623 = vset.pattern.permute.xlu0 0
    %624 = vperm.xlu0 %623, %v594
    %v625 = vpop.permute.xlu0 %624
    %628 = vset.pattern.permute.xlu0 0
    %629 = vperm.xlu0 %628, %v595
    %v630 = vpop.permute.xlu0 %629
    %633 = vset.pattern.permute.xlu0 0
    %634 = vperm.xlu0 %633, %v596
    %v635 = vpop.permute.xlu0 %634
    %v637 = vmul.f32 %v600, %v225
    %v638 = vmul.f32 %v605, %v226
    %v639 = vmul.f32 %v610, %v227
    %v640 = vmul.f32 %v615, %v228
    %v641 = vmul.f32 %v620, %v229
    %v642 = vmul.f32 %v625, %v230
    %v643 = vmul.f32 %v630, %v231
    %v644 = vmul.f32 %v635, %v232
    %653 = vrot.lane.b32.xlu0 %v637, 124
    %v654 = vpop.permute.xlu0 %653
    %655 = vrot.lane.b32.xlu0 %v638, 124
    %v656 = vpop.permute.xlu0 %655
    %657 = vrot.lane.b32.xlu0 %v639, 124
    %v658 = vpop.permute.xlu0 %657
    %659 = vrot.lane.b32.xlu0 %v640, 124
    %v660 = vpop.permute.xlu0 %659
    %661 = vrot.lane.b32.xlu0 %v641, 124
    %v662 = vpop.permute.xlu0 %661
    %663 = vrot.lane.b32.xlu0 %v642, 124
    %v664 = vpop.permute.xlu0 %663
    %665 = vrot.lane.b32.xlu0 %v643, 124
    %v666 = vpop.permute.xlu0 %665
    %667 = vrot.lane.b32.xlu0 %v644, 124
    %v668 = vpop.permute.xlu0 %667
    %v677 = vadd.f32 %v580, %v654
    %v678 = vadd.f32 %v581, %v656
    %v679 = vadd.f32 %v582, %v658
    %v680 = vadd.f32 %v583, %v660
    %v681 = vadd.f32 %v584, %v662
    %v682 = vadd.f32 %v585, %v664
    %v683 = vadd.f32 %v586, %v666
    %v684 = vadd.f32 %v587, %v668
    %s685 = scalar_lea.vmem %s4, 320
    %v686 = vld [vmem:[%s685] sm:$0xff]
    %v687 = vld [vmem:[%s685 + $0x8] sm:$0xff]
    %v688 = vld [vmem:[%s685 + $0x10] sm:$0xff]
    %v689 = vld [vmem:[%s685 + $0x18] sm:$0xff]
    %v690 = vld [vmem:[%s685 + $0x20] sm:$0xff]
    %v691 = vld [vmem:[%s685 + $0x28] sm:$0xff]
    %v692 = vld [vmem:[%s685 + $0x30] sm:$0xff]
    %v693 = vld [vmem:[%s685 + $0x38] sm:$0xff]
    %695 = vset.pattern.permute.xlu0 0
    %696 = vperm.xlu0 %695, %v686
    %v697 = vpop.permute.xlu0 %696
    %700 = vset.pattern.permute.xlu0 0
    %701 = vperm.xlu0 %700, %v687
    %v702 = vpop.permute.xlu0 %701
    %705 = vset.pattern.permute.xlu0 0
    %706 = vperm.xlu0 %705, %v688
    %v707 = vpop.permute.xlu0 %706
    %710 = vset.pattern.permute.xlu0 0
    %711 = vperm.xlu0 %710, %v689
    %v712 = vpop.permute.xlu0 %711
    %715 = vset.pattern.permute.xlu0 0
    %716 = vperm.xlu0 %715, %v690
    %v717 = vpop.permute.xlu0 %716
    %720 = vset.pattern.permute.xlu0 0
    %721 = vperm.xlu0 %720, %v691
    %v722 = vpop.permute.xlu0 %721
    %725 = vset.pattern.permute.xlu0 0
    %726 = vperm.xlu0 %725, %v692
    %v727 = vpop.permute.xlu0 %726
    %730 = vset.pattern.permute.xlu0 0
    %731 = vperm.xlu0 %730, %v693
    %v732 = vpop.permute.xlu0 %731
    %v734 = vmul.f32 %v697, %v225
    %v735 = vmul.f32 %v702, %v226
    %v736 = vmul.f32 %v707, %v227
    %v737 = vmul.f32 %v712, %v228
    %v738 = vmul.f32 %v717, %v229
    %v739 = vmul.f32 %v722, %v230
    %v740 = vmul.f32 %v727, %v231
    %v741 = vmul.f32 %v732, %v232
    %750 = vrot.lane.b32.xlu0 %v734, 123
    %v751 = vpop.permute.xlu0 %750
    %752 = vrot.lane.b32.xlu0 %v735, 123
    %v753 = vpop.permute.xlu0 %752
    %754 = vrot.lane.b32.xlu0 %v736, 123
    %v755 = vpop.permute.xlu0 %754
    %756 = vrot.lane.b32.xlu0 %v737, 123
    %v757 = vpop.permute.xlu0 %756
    %758 = vrot.lane.b32.xlu0 %v738, 123
    %v759 = vpop.permute.xlu0 %758
    %760 = vrot.lane.b32.xlu0 %v739, 123
    %v761 = vpop.permute.xlu0 %760
    %762 = vrot.lane.b32.xlu0 %v740, 123
    %v763 = vpop.permute.xlu0 %762
    %764 = vrot.lane.b32.xlu0 %v741, 123
    %v765 = vpop.permute.xlu0 %764
    %v774 = vadd.f32 %v677, %v751
    %v775 = vadd.f32 %v678, %v753
    %v776 = vadd.f32 %v679, %v755
    %v777 = vadd.f32 %v680, %v757
    %v778 = vadd.f32 %v681, %v759
    %v779 = vadd.f32 %v682, %v761
    %v780 = vadd.f32 %v683, %v763
    %v781 = vadd.f32 %v684, %v765
    %s782 = scalar_lea.vmem %s4, 384
    %v783 = vld [vmem:[%s782] sm:$0xff]
    %v784 = vld [vmem:[%s782 + $0x8] sm:$0xff]
    %v785 = vld [vmem:[%s782 + $0x10] sm:$0xff]
    %v786 = vld [vmem:[%s782 + $0x18] sm:$0xff]
    %v787 = vld [vmem:[%s782 + $0x20] sm:$0xff]
    %v788 = vld [vmem:[%s782 + $0x28] sm:$0xff]
    %v789 = vld [vmem:[%s782 + $0x30] sm:$0xff]
    %v790 = vld [vmem:[%s782 + $0x38] sm:$0xff]
    %792 = vset.pattern.permute.xlu0 0
    %793 = vperm.xlu0 %792, %v783
    %v794 = vpop.permute.xlu0 %793
    %797 = vset.pattern.permute.xlu0 0
    %798 = vperm.xlu0 %797, %v784
    %v799 = vpop.permute.xlu0 %798
    %802 = vset.pattern.permute.xlu0 0
    %803 = vperm.xlu0 %802, %v785
    %v804 = vpop.permute.xlu0 %803
    %807 = vset.pattern.permute.xlu0 0
    %808 = vperm.xlu0 %807, %v786
    %v809 = vpop.permute.xlu0 %808
    %812 = vset.pattern.permute.xlu0 0
    %813 = vperm.xlu0 %812, %v787
    %v814 = vpop.permute.xlu0 %813
    %817 = vset.pattern.permute.xlu0 0
    %818 = vperm.xlu0 %817, %v788
    %v819 = vpop.permute.xlu0 %818
    %822 = vset.pattern.permute.xlu0 0
    %823 = vperm.xlu0 %822, %v789
    %v824 = vpop.permute.xlu0 %823
    %827 = vset.pattern.permute.xlu0 0
    %828 = vperm.xlu0 %827, %v790
    %v829 = vpop.permute.xlu0 %828
    %v831 = vmul.f32 %v794, %v225
    %v832 = vmul.f32 %v799, %v226
    %v833 = vmul.f32 %v804, %v227
    %v834 = vmul.f32 %v809, %v228
    %v835 = vmul.f32 %v814, %v229
    %v836 = vmul.f32 %v819, %v230
    %v837 = vmul.f32 %v824, %v231
    %v838 = vmul.f32 %v829, %v232
    %847 = vrot.lane.b32.xlu0 %v831, 122
    %v848 = vpop.permute.xlu0 %847
    %849 = vrot.lane.b32.xlu0 %v832, 122
    %v850 = vpop.permute.xlu0 %849
    %851 = vrot.lane.b32.xlu0 %v833, 122
    %v852 = vpop.permute.xlu0 %851
    %853 = vrot.lane.b32.xlu0 %v834, 122
    %v854 = vpop.permute.xlu0 %853
    %855 = vrot.lane.b32.xlu0 %v835, 122
    %v856 = vpop.permute.xlu0 %855
    %857 = vrot.lane.b32.xlu0 %v836, 122
    %v858 = vpop.permute.xlu0 %857
    %859 = vrot.lane.b32.xlu0 %v837, 122
    %v860 = vpop.permute.xlu0 %859
    %861 = vrot.lane.b32.xlu0 %v838, 122
    %v862 = vpop.permute.xlu0 %861
    %v871 = vadd.f32 %v774, %v848
    %v872 = vadd.f32 %v775, %v850
    %v873 = vadd.f32 %v776, %v852
    %v874 = vadd.f32 %v777, %v854
    %v875 = vadd.f32 %v778, %v856
    %v876 = vadd.f32 %v779, %v858
    %v877 = vadd.f32 %v780, %v860
    %v878 = vadd.f32 %v781, %v862
    %879 = vrot.lane.b32.xlu0 %v145, 115
    %v880 = vpop.permute.xlu0 %879
    %881 = vrot.lane.b32.xlu0 %v150, 115
    %v882 = vpop.permute.xlu0 %881
    %883 = vrot.lane.b32.xlu0 %v155, 115
    %v884 = vpop.permute.xlu0 %883
    %885 = vrot.lane.b32.xlu0 %v160, 115
    %v886 = vpop.permute.xlu0 %885
    %887 = vrot.lane.b32.xlu0 %v165, 115
    %v888 = vpop.permute.xlu0 %887
    %889 = vrot.lane.b32.xlu0 %v170, 115
    %v890 = vpop.permute.xlu0 %889
    %891 = vrot.lane.b32.xlu0 %v175, 115
    %v892 = vpop.permute.xlu0 %891
    %893 = vrot.lane.b32.xlu0 %v180, 115
    %v894 = vpop.permute.xlu0 %893
    %v903 = vsel %vm215, 0.0, %v880
    %v904 = vsel %vm215, 0.0, %v882
    %v905 = vsel %vm215, 0.0, %v884
    %v906 = vsel %vm215, 0.0, %v886
    %v907 = vsel %vm215, 0.0, %v888
    %v908 = vsel %vm215, 0.0, %v890
    %v909 = vsel %vm215, 0.0, %v892
    %v910 = vsel %vm215, 0.0, %v894
    %v911 = vsel %vm224, %v903, 0.0
    %v912 = vsel %vm224, %v904, 0.0
    %v913 = vsel %vm224, %v905, 0.0
    %v914 = vsel %vm224, %v906, 0.0
    %v915 = vsel %vm224, %v907, 0.0
    %v916 = vsel %vm224, %v908, 0.0
    %v917 = vsel %vm224, %v909, 0.0
    %v918 = vsel %vm224, %v910, 0.0
    %v919 = vmul.f32 %v244, %v911
    %v920 = vmul.f32 %v249, %v912
    %v921 = vmul.f32 %v254, %v913
    %v922 = vmul.f32 %v259, %v914
    %v923 = vmul.f32 %v264, %v915
    %v924 = vmul.f32 %v269, %v916
    %v925 = vmul.f32 %v274, %v917
    %v926 = vmul.f32 %v279, %v918
    %v927 = vadd.f32 %v919, 0.0
    %v928 = vadd.f32 %v920, 0.0
    %v929 = vadd.f32 %v921, 0.0
    %v930 = vadd.f32 %v922, 0.0
    %v931 = vadd.f32 %v923, 0.0
    %v932 = vadd.f32 %v924, 0.0
    %v933 = vadd.f32 %v925, 0.0
    %v934 = vadd.f32 %v926, 0.0
    %v935 = vmul.f32 %v309, %v911
    %v936 = vmul.f32 %v314, %v912
    %v937 = vmul.f32 %v319, %v913
    %v938 = vmul.f32 %v324, %v914
    %v939 = vmul.f32 %v329, %v915
    %v940 = vmul.f32 %v334, %v916
    %v941 = vmul.f32 %v339, %v917
    %v942 = vmul.f32 %v344, %v918
    %951 = vrot.lane.b32.xlu0 %v935, 127
    %v952 = vpop.permute.xlu0 %951
    %953 = vrot.lane.b32.xlu0 %v936, 127
    %v954 = vpop.permute.xlu0 %953
    %955 = vrot.lane.b32.xlu0 %v937, 127
    %v956 = vpop.permute.xlu0 %955
    %957 = vrot.lane.b32.xlu0 %v938, 127
    %v958 = vpop.permute.xlu0 %957
    %959 = vrot.lane.b32.xlu0 %v939, 127
    %v960 = vpop.permute.xlu0 %959
    %961 = vrot.lane.b32.xlu0 %v940, 127
    %v962 = vpop.permute.xlu0 %961
    %963 = vrot.lane.b32.xlu0 %v941, 127
    %v964 = vpop.permute.xlu0 %963
    %965 = vrot.lane.b32.xlu0 %v942, 127
    %v966 = vpop.permute.xlu0 %965
    %v975 = vadd.f32 %v927, %v952
    %v976 = vadd.f32 %v928, %v954
    %v977 = vadd.f32 %v929, %v956
    %v978 = vadd.f32 %v930, %v958
    %v979 = vadd.f32 %v931, %v960
    %v980 = vadd.f32 %v932, %v962
    %v981 = vadd.f32 %v933, %v964
    %v982 = vadd.f32 %v934, %v966
    %v983 = vmul.f32 %v406, %v911
    %v984 = vmul.f32 %v411, %v912
    %v985 = vmul.f32 %v416, %v913
    %v986 = vmul.f32 %v421, %v914
    %v987 = vmul.f32 %v426, %v915
    %v988 = vmul.f32 %v431, %v916
    %v989 = vmul.f32 %v436, %v917
    %v990 = vmul.f32 %v441, %v918
    %999 = vrot.lane.b32.xlu0 %v983, 126
    %v1000 = vpop.permute.xlu0 %999
    %1001 = vrot.lane.b32.xlu0 %v984, 126
    %v1002 = vpop.permute.xlu0 %1001
    %1003 = vrot.lane.b32.xlu0 %v985, 126
    %v1004 = vpop.permute.xlu0 %1003
    %1005 = vrot.lane.b32.xlu0 %v986, 126
    %v1006 = vpop.permute.xlu0 %1005
    %1007 = vrot.lane.b32.xlu0 %v987, 126
    %v1008 = vpop.permute.xlu0 %1007
    %1009 = vrot.lane.b32.xlu0 %v988, 126
    %v1010 = vpop.permute.xlu0 %1009
    %1011 = vrot.lane.b32.xlu0 %v989, 126
    %v1012 = vpop.permute.xlu0 %1011
    %1013 = vrot.lane.b32.xlu0 %v990, 126
    %v1014 = vpop.permute.xlu0 %1013
    %v1023 = vadd.f32 %v975, %v1000
    %v1024 = vadd.f32 %v976, %v1002
    %v1025 = vadd.f32 %v977, %v1004
    %v1026 = vadd.f32 %v978, %v1006
    %v1027 = vadd.f32 %v979, %v1008
    %v1028 = vadd.f32 %v980, %v1010
    %v1029 = vadd.f32 %v981, %v1012
    %v1030 = vadd.f32 %v982, %v1014
    %v1031 = vmul.f32 %v503, %v911
    %v1032 = vmul.f32 %v508, %v912
    %v1033 = vmul.f32 %v513, %v913
    %v1034 = vmul.f32 %v518, %v914
    %v1035 = vmul.f32 %v523, %v915
    %v1036 = vmul.f32 %v528, %v916
    %v1037 = vmul.f32 %v533, %v917
    %v1038 = vmul.f32 %v538, %v918
    %1047 = vrot.lane.b32.xlu0 %v1031, 125
    %v1048 = vpop.permute.xlu0 %1047
    %1049 = vrot.lane.b32.xlu0 %v1032, 125
    %v1050 = vpop.permute.xlu0 %1049
    %1051 = vrot.lane.b32.xlu0 %v1033, 125
    %v1052 = vpop.permute.xlu0 %1051
    %1053 = vrot.lane.b32.xlu0 %v1034, 125
    %v1054 = vpop.permute.xlu0 %1053
    %1055 = vrot.lane.b32.xlu0 %v1035, 125
    %v1056 = vpop.permute.xlu0 %1055
    %1057 = vrot.lane.b32.xlu0 %v1036, 125
    %v1058 = vpop.permute.xlu0 %1057
    %1059 = vrot.lane.b32.xlu0 %v1037, 125
    %v1060 = vpop.permute.xlu0 %1059
    %1061 = vrot.lane.b32.xlu0 %v1038, 125
    %v1062 = vpop.permute.xlu0 %1061
    %v1071 = vadd.f32 %v1023, %v1048
    %v1072 = vadd.f32 %v1024, %v1050
    %v1073 = vadd.f32 %v1025, %v1052
    %v1074 = vadd.f32 %v1026, %v1054
    %v1075 = vadd.f32 %v1027, %v1056
    %v1076 = vadd.f32 %v1028, %v1058
    %v1077 = vadd.f32 %v1029, %v1060
    %v1078 = vadd.f32 %v1030, %v1062
    %v1079 = vmul.f32 %v600, %v911
    %v1080 = vmul.f32 %v605, %v912
    %v1081 = vmul.f32 %v610, %v913
    %v1082 = vmul.f32 %v615, %v914
    %v1083 = vmul.f32 %v620, %v915
    %v1084 = vmul.f32 %v625, %v916
    %v1085 = vmul.f32 %v630, %v917
    %v1086 = vmul.f32 %v635, %v918
    %1095 = vrot.lane.b32.xlu0 %v1079, 124
    %v1096 = vpop.permute.xlu0 %1095
    %1097 = vrot.lane.b32.xlu0 %v1080, 124
    %v1098 = vpop.permute.xlu0 %1097
    %1099 = vrot.lane.b32.xlu0 %v1081, 124
    %v1100 = vpop.permute.xlu0 %1099
    %1101 = vrot.lane.b32.xlu0 %v1082, 124
    %v1102 = vpop.permute.xlu0 %1101
    %1103 = vrot.lane.b32.xlu0 %v1083, 124
    %v1104 = vpop.permute.xlu0 %1103
    %1105 = vrot.lane.b32.xlu0 %v1084, 124
    %v1106 = vpop.permute.xlu0 %1105
    %1107 = vrot.lane.b32.xlu0 %v1085, 124
    %v1108 = vpop.permute.xlu0 %1107
    %1109 = vrot.lane.b32.xlu0 %v1086, 124
    %v1110 = vpop.permute.xlu0 %1109
    %v1119 = vadd.f32 %v1071, %v1096
    %v1120 = vadd.f32 %v1072, %v1098
    %v1121 = vadd.f32 %v1073, %v1100
    %v1122 = vadd.f32 %v1074, %v1102
    %v1123 = vadd.f32 %v1075, %v1104
    %v1124 = vadd.f32 %v1076, %v1106
    %v1125 = vadd.f32 %v1077, %v1108
    %v1126 = vadd.f32 %v1078, %v1110
    %v1127 = vmul.f32 %v697, %v911
    %v1128 = vmul.f32 %v702, %v912
    %v1129 = vmul.f32 %v707, %v913
    %v1130 = vmul.f32 %v712, %v914
    %v1131 = vmul.f32 %v717, %v915
    %v1132 = vmul.f32 %v722, %v916
    %v1133 = vmul.f32 %v727, %v917
    %v1134 = vmul.f32 %v732, %v918
    %1143 = vrot.lane.b32.xlu0 %v1127, 123
    %v1144 = vpop.permute.xlu0 %1143
    %1145 = vrot.lane.b32.xlu0 %v1128, 123
    %v1146 = vpop.permute.xlu0 %1145
    %1147 = vrot.lane.b32.xlu0 %v1129, 123
    %v1148 = vpop.permute.xlu0 %1147
    %1149 = vrot.lane.b32.xlu0 %v1130, 123
    %v1150 = vpop.permute.xlu0 %1149
    %1151 = vrot.lane.b32.xlu0 %v1131, 123
    %v1152 = vpop.permute.xlu0 %1151
    %1153 = vrot.lane.b32.xlu0 %v1132, 123
    %v1154 = vpop.permute.xlu0 %1153
    %1155 = vrot.lane.b32.xlu0 %v1133, 123
    %v1156 = vpop.permute.xlu0 %1155
    %1157 = vrot.lane.b32.xlu0 %v1134, 123
    %v1158 = vpop.permute.xlu0 %1157
    %v1167 = vadd.f32 %v1119, %v1144
    %v1168 = vadd.f32 %v1120, %v1146
    %v1169 = vadd.f32 %v1121, %v1148
    %v1170 = vadd.f32 %v1122, %v1150
    %v1171 = vadd.f32 %v1123, %v1152
    %v1172 = vadd.f32 %v1124, %v1154
    %v1173 = vadd.f32 %v1125, %v1156
    %v1174 = vadd.f32 %v1126, %v1158
    %v1175 = vmul.f32 %v794, %v911
    %v1176 = vmul.f32 %v799, %v912
    %v1177 = vmul.f32 %v804, %v913
    %v1178 = vmul.f32 %v809, %v914
    %v1179 = vmul.f32 %v814, %v915
    %v1180 = vmul.f32 %v819, %v916
    %v1181 = vmul.f32 %v824, %v917
    %v1182 = vmul.f32 %v829, %v918
    %1191 = vrot.lane.b32.xlu0 %v1175, 122
    %v1192 = vpop.permute.xlu0 %1191
    %1193 = vrot.lane.b32.xlu0 %v1176, 122
    %v1194 = vpop.permute.xlu0 %1193
    %1195 = vrot.lane.b32.xlu0 %v1177, 122
    %v1196 = vpop.permute.xlu0 %1195
    %1197 = vrot.lane.b32.xlu0 %v1178, 122
    %v1198 = vpop.permute.xlu0 %1197
    %1199 = vrot.lane.b32.xlu0 %v1179, 122
    %v1200 = vpop.permute.xlu0 %1199
    %1201 = vrot.lane.b32.xlu0 %v1180, 122
    %v1202 = vpop.permute.xlu0 %1201
    %1203 = vrot.lane.b32.xlu0 %v1181, 122
    %v1204 = vpop.permute.xlu0 %1203
    %1205 = vrot.lane.b32.xlu0 %v1182, 122
    %v1206 = vpop.permute.xlu0 %1205
    %v1215 = vadd.f32 %v1167, %v1192
    %v1216 = vadd.f32 %v1168, %v1194
    %v1217 = vadd.f32 %v1169, %v1196
    %v1218 = vadd.f32 %v1170, %v1198
    %v1219 = vadd.f32 %v1171, %v1200
    %v1220 = vadd.f32 %v1172, %v1202
    %v1221 = vadd.f32 %v1173, %v1204
    %v1222 = vadd.f32 %v1174, %v1206
    %vm1223 = vcmask 130048
    %v1224 = vsel %vm1223, %v871, 0.0
    %1225 = vadd.xlane.f32.xlu0 %v1224
    %v1226 = vpop.xlane.xlu0 %1225
    %v1227 = vsel %vm1223, %v872, 0.0
    %1228 = vadd.xlane.f32.xlu0 %v1227
    %v1229 = vpop.xlane.xlu0 %1228
    %v1230 = vsel %vm1223, %v873, 0.0
    %1231 = vadd.xlane.f32.xlu0 %v1230
    %v1232 = vpop.xlane.xlu0 %1231
    %v1233 = vsel %vm1223, %v874, 0.0
    %1234 = vadd.xlane.f32.xlu0 %v1233
    %v1235 = vpop.xlane.xlu0 %1234
    %v1236 = vsel %vm1223, %v875, 0.0
    %1237 = vadd.xlane.f32.xlu0 %v1236
    %v1238 = vpop.xlane.xlu0 %1237
    %v1239 = vsel %vm1223, %v876, 0.0
    %1240 = vadd.xlane.f32.xlu0 %v1239
    %v1241 = vpop.xlane.xlu0 %1240
    %v1242 = vsel %vm1223, %v877, 0.0
    %1243 = vadd.xlane.f32.xlu0 %v1242
    %v1244 = vpop.xlane.xlu0 %1243
    %v1245 = vsel %vm1223, %v878, 0.0
    %1246 = vadd.xlane.f32.xlu0 %v1245
    %v1247 = vpop.xlane.xlu0 %1246
    %v1248 = vmul.f32 %v871, %v871
    %v1249 = vmul.f32 %v872, %v872
    %v1250 = vmul.f32 %v873, %v873
    %v1251 = vmul.f32 %v874, %v874
    %v1252 = vmul.f32 %v875, %v875
    %v1253 = vmul.f32 %v876, %v876
    %v1254 = vmul.f32 %v877, %v877
    %v1255 = vmul.f32 %v878, %v878
    %v1256 = vsel %vm1223, %v1248, 0.0
    %1257 = vadd.xlane.f32.xlu0 %v1256
    %v1258 = vpop.xlane.xlu0 %1257
    %v1259 = vsel %vm1223, %v1249, 0.0
    %1260 = vadd.xlane.f32.xlu0 %v1259
    %v1261 = vpop.xlane.xlu0 %1260
    %v1262 = vsel %vm1223, %v1250, 0.0
    %1263 = vadd.xlane.f32.xlu0 %v1262
    %v1264 = vpop.xlane.xlu0 %1263
    %v1265 = vsel %vm1223, %v1251, 0.0
    %1266 = vadd.xlane.f32.xlu0 %v1265
    %v1267 = vpop.xlane.xlu0 %1266
    %v1268 = vsel %vm1223, %v1252, 0.0
    %1269 = vadd.xlane.f32.xlu0 %v1268
    %v1270 = vpop.xlane.xlu0 %1269
    %v1271 = vsel %vm1223, %v1253, 0.0
    %1272 = vadd.xlane.f32.xlu0 %v1271
    %v1273 = vpop.xlane.xlu0 %1272
    %v1274 = vsel %vm1223, %v1254, 0.0
    %1275 = vadd.xlane.f32.xlu0 %v1274
    %v1276 = vpop.xlane.xlu0 %1275
    %v1277 = vsel %vm1223, %v1255, 0.0
    %1278 = vadd.xlane.f32.xlu0 %v1277
    %v1279 = vpop.xlane.xlu0 %1278
    %v1280 = vsel %vm1223, %v1215, 0.0
    %1281 = vadd.xlane.f32.xlu0 %v1280
    %v1282 = vpop.xlane.xlu0 %1281
    %v1283 = vsel %vm1223, %v1216, 0.0
    %1284 = vadd.xlane.f32.xlu0 %v1283
    %v1285 = vpop.xlane.xlu0 %1284
    %v1286 = vsel %vm1223, %v1217, 0.0
    %1287 = vadd.xlane.f32.xlu0 %v1286
    %v1288 = vpop.xlane.xlu0 %1287
    %v1289 = vsel %vm1223, %v1218, 0.0
    %1290 = vadd.xlane.f32.xlu0 %v1289
    %v1291 = vpop.xlane.xlu0 %1290
    %v1292 = vsel %vm1223, %v1219, 0.0
    %1293 = vadd.xlane.f32.xlu0 %v1292
    %v1294 = vpop.xlane.xlu0 %1293
    %v1295 = vsel %vm1223, %v1220, 0.0
    %1296 = vadd.xlane.f32.xlu0 %v1295
    %v1297 = vpop.xlane.xlu0 %1296
    %v1298 = vsel %vm1223, %v1221, 0.0
    %1299 = vadd.xlane.f32.xlu0 %v1298
    %v1300 = vpop.xlane.xlu0 %1299
    %v1301 = vsel %vm1223, %v1222, 0.0
    %1302 = vadd.xlane.f32.xlu0 %v1301
    %v1303 = vpop.xlane.xlu0 %1302
    %v1304 = vmul.f32 %v1215, %v1215
    %v1305 = vmul.f32 %v1216, %v1216
    %v1306 = vmul.f32 %v1217, %v1217
    %v1307 = vmul.f32 %v1218, %v1218
    %v1308 = vmul.f32 %v1219, %v1219
    %v1309 = vmul.f32 %v1220, %v1220
    %v1310 = vmul.f32 %v1221, %v1221
    %v1311 = vmul.f32 %v1222, %v1222
    %v1312 = vsel %vm1223, %v1304, 0.0
    %1313 = vadd.xlane.f32.xlu0 %v1312
    %v1314 = vpop.xlane.xlu0 %1313
    %v1315 = vsel %vm1223, %v1305, 0.0
    %1316 = vadd.xlane.f32.xlu0 %v1315
    %v1317 = vpop.xlane.xlu0 %1316
    %v1318 = vsel %vm1223, %v1306, 0.0
    %1319 = vadd.xlane.f32.xlu0 %v1318
    %v1320 = vpop.xlane.xlu0 %1319
    %v1321 = vsel %vm1223, %v1307, 0.0
    %1322 = vadd.xlane.f32.xlu0 %v1321
    %v1323 = vpop.xlane.xlu0 %1322
    %v1324 = vsel %vm1223, %v1308, 0.0
    %1325 = vadd.xlane.f32.xlu0 %v1324
    %v1326 = vpop.xlane.xlu0 %1325
    %v1327 = vsel %vm1223, %v1309, 0.0
    %1328 = vadd.xlane.f32.xlu0 %v1327
    %v1329 = vpop.xlane.xlu0 %1328
    %v1330 = vsel %vm1223, %v1310, 0.0
    %1331 = vadd.xlane.f32.xlu0 %v1330
    %v1332 = vpop.xlane.xlu0 %1331
    %v1333 = vsel %vm1223, %v1311, 0.0
    %1334 = vadd.xlane.f32.xlu0 %v1333
    %v1335 = vpop.xlane.xlu0 %1334
    %vm1336 = vcmask 7168
    %v1337 = vsel %vm1336, %v1226, %v1258
    %v1338 = vsel %vm1336, %v1229, %v1261
    %v1339 = vsel %vm1336, %v1232, %v1264
    %v1340 = vsel %vm1336, %v1235, %v1267
    %v1341 = vsel %vm1336, %v1238, %v1270
    %v1342 = vsel %vm1336, %v1241, %v1273
    %v1343 = vsel %vm1336, %v1244, %v1276
    %v1344 = vsel %vm1336, %v1247, %v1279
    %vm1345 = vcmask 15360
    %v1346 = vsel %vm1345, %v1337, %v1282
    %v1347 = vsel %vm1345, %v1338, %v1285
    %v1348 = vsel %vm1345, %v1339, %v1288
    %v1349 = vsel %vm1345, %v1340, %v1291
    %v1350 = vsel %vm1345, %v1341, %v1294
    %v1351 = vsel %vm1345, %v1342, %v1297
    %v1352 = vsel %vm1345, %v1343, %v1300
    %v1353 = vsel %vm1345, %v1344, %v1303
    %v1354 = vsel %vm215, %v1346, %v1314
    %v1355 = vsel %vm215, %v1347, %v1317
    %v1356 = vsel %vm215, %v1348, %v1320
    %v1357 = vsel %vm215, %v1349, %v1323
    %v1358 = vsel %vm215, %v1350, %v1326
    %v1359 = vsel %vm215, %v1351, %v1329
    %v1360 = vsel %vm215, %v1352, %v1332
    %v1361 = vsel %vm215, %v1353, %v1335
    %v1362 = vld [vmem:[%s7] sm:$0xff]
    %v1363 = vld [vmem:[%s7 + $0x8] sm:$0xff]
    %v1364 = vld [vmem:[%s7 + $0x10] sm:$0xff]
    %v1365 = vld [vmem:[%s7 + $0x18] sm:$0xff]
    %v1366 = vld [vmem:[%s7 + $0x20] sm:$0xff]
    %v1367 = vld [vmem:[%s7 + $0x28] sm:$0xff]
    %v1368 = vld [vmem:[%s7 + $0x30] sm:$0xff]
    %v1369 = vld [vmem:[%s7 + $0x38] sm:$0xff]
    %vm1370 = vcmask 523264
    %v1372 = vsel %vm1370, %v1362, 0
    %v1375 = vsel %vm1370, %v1363, 0
    %v1378 = vsel %vm1370, %v1364, 0
    %v1381 = vsel %vm1370, %v1365, 0
    %v1384 = vsel %vm1370, %v1366, 0
    %v1387 = vsel %vm1370, %v1367, 0
    %v1390 = vsel %vm1370, %v1368, 0
    %v1393 = vsel %vm1370, %v1369, 0
    %1395 = vmatprep.subr.mxu0 0.0
    %1396 = vmatpush1.msra.mxu0 %v1354
    %1397 = vmatprep.subr.mxu0 0.0
    %1398 = vmatpush1.msra.mxu0 %v1355
    %1399 = vmatprep.subr.mxu0 0.0
    %1400 = vmatpush1.msra.mxu0 %v1356
    %1401 = vmatprep.subr.mxu0 0.0
    %1402 = vmatpush1.msra.mxu0 %v1357
    %1403 = vmatprep.subr.mxu0 0.0
    %1404 = vmatpush1.msra.mxu0 %v1358
    %1405 = vmatprep.subr.mxu0 0.0
    %1406 = vmatpush1.msra.mxu0 %v1359
    %1407 = vmatprep.subr.mxu0 0.0
    %1408 = vmatpush1.msra.mxu0 %v1360
    %1409 = vmatprep.subr.mxu0 0.0
    %1410 = vmatpush1.msra.mxu0 %v1361
    %1411 = vmatprep.subr.mxu0 0.0
    %1412 = vmatpush1.msra.mxu0 0.0
    %1413 = vmatprep.subr.mxu0 0.0
    %1414 = vmatpush1.msra.mxu0 0.0
    %1415 = vmatprep.subr.mxu0 0.0
    %1416 = vmatpush1.msra.mxu0 0.0
    %1417 = vmatprep.subr.mxu0 0.0
    %1418 = vmatpush1.msra.mxu0 0.0
    %1419 = vmatprep.subr.mxu0 0.0
    %1420 = vmatpush1.msra.mxu0 0.0
    %1421 = vmatprep.subr.mxu0 0.0
    %1422 = vmatpush1.msra.mxu0 0.0
    %1423 = vmatprep.subr.mxu0 0.0
    %1424 = vmatpush1.msra.mxu0 0.0
    %1425 = vmatprep.subr.mxu0 0.0
    %1426 = vmatpush1.msra.mxu0 0.0
    %1427 = vmatprep.subr.mxu0 0.0
    %1428 = vmatpush1.msra.mxu0 0.0
    %1429 = vmatprep.subr.mxu0 0.0
    %1430 = vmatpush1.msra.mxu0 0.0
    %1431 = vmatprep.subr.mxu0 0.0
    %1432 = vmatpush1.msra.mxu0 0.0
    %1433 = vmatprep.subr.mxu0 0.0
    %1434 = vmatpush1.msra.mxu0 0.0
    %1435 = vmatprep.subr.mxu0 0.0
    %1436 = vmatpush1.msra.mxu0 0.0
    %1437 = vmatprep.subr.mxu0 0.0
    %1438 = vmatpush1.msra.mxu0 0.0
    %1439 = vmatprep.subr.mxu0 0.0
    %1440 = vmatpush1.msra.mxu0 0.0
    %1441 = vmatprep.subr.mxu0 0.0
    %1442 = vmatpush1.msra.mxu0 0.0
    %1443 = vmatprep.subr.mxu0 0.0
    %1444 = vmatpush1.msra.mxu0 0.0
    %1445 = vmatprep.subr.mxu0 0.0
    %1446 = vmatpush1.msra.mxu0 0.0
    %1447 = vmatprep.subr.mxu0 0.0
    %1448 = vmatpush1.msra.mxu0 0.0
    %1449 = vmatprep.subr.mxu0 0.0
    %1450 = vmatpush1.msra.mxu0 0.0
    %1451 = vmatprep.subr.mxu0 0.0
    %1452 = vmatpush1.msra.mxu0 0.0
    %1453 = vmatprep.subr.mxu0 0.0
    %1454 = vmatpush1.msra.mxu0 0.0
    %1455 = vmatprep.subr.mxu0 0.0
    %1456 = vmatpush1.msra.mxu0 0.0
    %1457 = vmatprep.subr.mxu0 0.0
    %1458 = vmatpush1.msra.mxu0 0.0
    %1459 = vmatprep.mubr.f32.mxu0 0.0
    %1460 = vmatmul.mubr.f32.gmra.mrb[0].mxu0 %v1372
    %v1461 = vpop.f32.mrb[0].mxu0
    %v1462 = vadd.f32 0.0, %v1461
    %v1463 = vpop.f32.mrb[0].mxu0
    %1464 = vmatprep.mubr.f32.mxu0 0.0
    %1465 = vmatmul.mubr.f32.gmra.mrb[0].mxu0 %v1375
    %v1466 = vpop.f32.mrb[0].mxu0
    %v1467 = vadd.f32 0.0, %v1466
    %v1468 = vpop.f32.mrb[0].mxu0
    %1469 = vmatprep.mubr.f32.mxu0 0.0
    %1470 = vmatmul.mubr.f32.gmra.mrb[0].mxu0 %v1378
    %v1471 = vpop.f32.mrb[0].mxu0
    %v1472 = vadd.f32 0.0, %v1471
    %v1473 = vpop.f32.mrb[0].mxu0
    %1474 = vmatprep.mubr.f32.mxu0 0.0
    %1475 = vmatmul.mubr.f32.gmra.mrb[0].mxu0 %v1381
    %v1476 = vpop.f32.mrb[0].mxu0
    %v1477 = vadd.f32 0.0, %v1476
    %v1478 = vpop.f32.mrb[0].mxu0
    %1479 = vmatprep.mubr.f32.mxu0 0.0
    %1480 = vmatmul.mubr.f32.gmra.mrb[0].mxu0 %v1384
    %v1481 = vpop.f32.mrb[0].mxu0
    %v1482 = vadd.f32 0.0, %v1481
    %v1483 = vpop.f32.mrb[0].mxu0
    %1484 = vmatprep.mubr.f32.mxu0 0.0
    %1485 = vmatmul.mubr.f32.gmra.mrb[0].mxu0 %v1387
    %v1486 = vpop.f32.mrb[0].mxu0
    %v1487 = vadd.f32 0.0, %v1486
    %v1488 = vpop.f32.mrb[0].mxu0
    %1489 = vmatprep.mubr.f32.mxu0 0.0
    %1490 = vmatmul.mubr.f32.gmra.mrb[0].mxu0 %v1390
    %v1491 = vpop.f32.mrb[0].mxu0
    %v1492 = vadd.f32 0.0, %v1491
    %v1493 = vpop.f32.mrb[0].mxu0
    %1494 = vmatprep.mubr.f32.mxu0 0.0
    %1495 = vmatmul.mubr.f32.gmra.mrb[0].mxu0 %v1393
    %v1496 = vpop.f32.mrb[0].mxu0
    %v1497 = vadd.f32 0.0, %v1496
    %v1498 = vpop.f32.mrb[0].mxu0
    %1499 = vdwg.mxu0
    %v1500 = vrcp.pop 32.0
    %v1501 = vmul.f32 %v1462, %v1500
    %v1502 = vmul.f32 %v1467, %v1500
    %v1503 = vmul.f32 %v1472, %v1500
    %v1504 = vmul.f32 %v1477, %v1500
    %v1505 = vmul.f32 %v1482, %v1500
    %v1506 = vmul.f32 %v1487, %v1500
    %v1507 = vmul.f32 %v1492, %v1500
    %v1508 = vmul.f32 %v1497, %v1500
    %v1509 = vmul.f32 %v1501, %v1501
    %v1510 = vmul.f32 %v1502, %v1502
    %v1511 = vmul.f32 %v1503, %v1503
    %v1512 = vmul.f32 %v1504, %v1504
    %v1513 = vmul.f32 %v1505, %v1505
    %v1514 = vmul.f32 %v1506, %v1506
    %v1515 = vmul.f32 %v1507, %v1507
    %v1516 = vmul.f32 %v1508, %v1508
    %1525 = vrot.lane.b32.xlu0 %v1509, 1
    %v1526 = vpop.permute.xlu0 %1525
    %1527 = vrot.lane.b32.xlu0 %v1510, 1
    %v1528 = vpop.permute.xlu0 %1527
    %1529 = vrot.lane.b32.xlu0 %v1511, 1
    %v1530 = vpop.permute.xlu0 %1529
    %1531 = vrot.lane.b32.xlu0 %v1512, 1
    %v1532 = vpop.permute.xlu0 %1531
    %1533 = vrot.lane.b32.xlu0 %v1513, 1
    %v1534 = vpop.permute.xlu0 %1533
    %1535 = vrot.lane.b32.xlu0 %v1514, 1
    %v1536 = vpop.permute.xlu0 %1535
    %1537 = vrot.lane.b32.xlu0 %v1515, 1
    %v1538 = vpop.permute.xlu0 %1537
    %1539 = vrot.lane.b32.xlu0 %v1516, 1
    %v1540 = vpop.permute.xlu0 %1539
    %v1549 = vsub.f32 %v1501, %v1526
    %v1550 = vsub.f32 %v1502, %v1528
    %v1551 = vsub.f32 %v1503, %v1530
    %v1552 = vsub.f32 %v1504, %v1532
    %v1553 = vsub.f32 %v1505, %v1534
    %v1554 = vsub.f32 %v1506, %v1536
    %v1555 = vsub.f32 %v1507, %v1538
    %v1556 = vsub.f32 %v1508, %v1540
    %v1557 = vld [vmem:[%s5] sm:$0xff]
    %v1558 = vld [vmem:[%s5 + $0x8] sm:$0xff]
    %v1559 = vld [vmem:[%s5 + $0x10] sm:$0xff]
    %v1560 = vld [vmem:[%s5 + $0x18] sm:$0xff]
    %v1561 = vld [vmem:[%s5 + $0x20] sm:$0xff]
    %v1562 = vld [vmem:[%s5 + $0x28] sm:$0xff]
    %v1563 = vld [vmem:[%s5 + $0x30] sm:$0xff]
    %v1564 = vld [vmem:[%s5 + $0x38] sm:$0xff]
    %v1565 = vld [vmem:[%s6] sm:$0xff]
    %v1566 = vld [vmem:[%s6 + $0x8] sm:$0xff]
    %v1567 = vld [vmem:[%s6 + $0x10] sm:$0xff]
    %v1568 = vld [vmem:[%s6 + $0x18] sm:$0xff]
    %v1569 = vld [vmem:[%s6 + $0x20] sm:$0xff]
    %v1570 = vld [vmem:[%s6 + $0x28] sm:$0xff]
    %v1571 = vld [vmem:[%s6 + $0x30] sm:$0xff]
    %v1572 = vld [vmem:[%s6 + $0x38] sm:$0xff]
    %1574 = vset.pattern.permute.xlu0 0
    %1575 = vperm.xlu0 %1574, %v1501
    %v1576 = vpop.permute.xlu0 %1575
    %1579 = vset.pattern.permute.xlu0 0
    %1580 = vperm.xlu0 %1579, %v1502
    %v1581 = vpop.permute.xlu0 %1580
    %1584 = vset.pattern.permute.xlu0 0
    %1585 = vperm.xlu0 %1584, %v1503
    %v1586 = vpop.permute.xlu0 %1585
    %1589 = vset.pattern.permute.xlu0 0
    %1590 = vperm.xlu0 %1589, %v1504
    %v1591 = vpop.permute.xlu0 %1590
    %1594 = vset.pattern.permute.xlu0 0
    %1595 = vperm.xlu0 %1594, %v1505
    %v1596 = vpop.permute.xlu0 %1595
    %1599 = vset.pattern.permute.xlu0 0
    %1600 = vperm.xlu0 %1599, %v1506
    %v1601 = vpop.permute.xlu0 %1600
    %1604 = vset.pattern.permute.xlu0 0
    %1605 = vperm.xlu0 %1604, %v1507
    %v1606 = vpop.permute.xlu0 %1605
    %1609 = vset.pattern.permute.xlu0 0
    %1610 = vperm.xlu0 %1609, %v1508
    %v1611 = vpop.permute.xlu0 %1610
    %v1613 = vsub.f32 %v871, %v1576
    %v1614 = vsub.f32 %v872, %v1581
    %v1615 = vsub.f32 %v873, %v1586
    %v1616 = vsub.f32 %v874, %v1591
    %v1617 = vsub.f32 %v875, %v1596
    %v1618 = vsub.f32 %v876, %v1601
    %v1619 = vsub.f32 %v877, %v1606
    %v1620 = vsub.f32 %v878, %v1611
    %v1621 = vadd.f32 %v1549, 1e-05
    %v1622 = vadd.f32 %v1550, 1e-05
    %v1623 = vadd.f32 %v1551, 1e-05
    %v1624 = vadd.f32 %v1552, 1e-05
    %v1625 = vadd.f32 %v1553, 1e-05
    %v1626 = vadd.f32 %v1554, 1e-05
    %v1627 = vadd.f32 %v1555, 1e-05
    %v1628 = vadd.f32 %v1556, 1e-05
    %v1629 = vrsqrt.pop %v1621
    %v1630 = vrsqrt.pop %v1622
    %v1631 = vrsqrt.pop %v1623
    %v1632 = vrsqrt.pop %v1624
    %v1633 = vrsqrt.pop %v1625
    %v1634 = vrsqrt.pop %v1626
    %v1635 = vrsqrt.pop %v1627
    %v1636 = vrsqrt.pop %v1628
    %1638 = vset.pattern.permute.xlu0 1
    %1639 = vperm.xlu0 %1638, %v1629
    %v1640 = vpop.permute.xlu0 %1639
    %1643 = vset.pattern.permute.xlu0 1
    %1644 = vperm.xlu0 %1643, %v1630
    %v1645 = vpop.permute.xlu0 %1644
    %1648 = vset.pattern.permute.xlu0 1
    %1649 = vperm.xlu0 %1648, %v1631
    %v1650 = vpop.permute.xlu0 %1649
    %1653 = vset.pattern.permute.xlu0 1
    %1654 = vperm.xlu0 %1653, %v1632
    %v1655 = vpop.permute.xlu0 %1654
    %1658 = vset.pattern.permute.xlu0 1
    %1659 = vperm.xlu0 %1658, %v1633
    %v1660 = vpop.permute.xlu0 %1659
    %1663 = vset.pattern.permute.xlu0 1
    %1664 = vperm.xlu0 %1663, %v1634
    %v1665 = vpop.permute.xlu0 %1664
    %1668 = vset.pattern.permute.xlu0 1
    %1669 = vperm.xlu0 %1668, %v1635
    %v1670 = vpop.permute.xlu0 %1669
    %1673 = vset.pattern.permute.xlu0 1
    %1674 = vperm.xlu0 %1673, %v1636
    %v1675 = vpop.permute.xlu0 %1674
    %v1677 = vmul.f32 %v1613, %v1640
    %v1678 = vmul.f32 %v1614, %v1645
    %v1679 = vmul.f32 %v1615, %v1650
    %v1680 = vmul.f32 %v1616, %v1655
    %v1681 = vmul.f32 %v1617, %v1660
    %v1682 = vmul.f32 %v1618, %v1665
    %v1683 = vmul.f32 %v1619, %v1670
    %v1684 = vmul.f32 %v1620, %v1675
    %1686 = vset.pattern.permute.xlu0 0
    %1687 = vperm.xlu0 %1686, %v1557
    %v1688 = vpop.permute.xlu0 %1687
    %1691 = vset.pattern.permute.xlu0 0
    %1692 = vperm.xlu0 %1691, %v1558
    %v1693 = vpop.permute.xlu0 %1692
    %1696 = vset.pattern.permute.xlu0 0
    %1697 = vperm.xlu0 %1696, %v1559
    %v1698 = vpop.permute.xlu0 %1697
    %1701 = vset.pattern.permute.xlu0 0
    %1702 = vperm.xlu0 %1701, %v1560
    %v1703 = vpop.permute.xlu0 %1702
    %1706 = vset.pattern.permute.xlu0 0
    %1707 = vperm.xlu0 %1706, %v1561
    %v1708 = vpop.permute.xlu0 %1707
    %1711 = vset.pattern.permute.xlu0 0
    %1712 = vperm.xlu0 %1711, %v1562
    %v1713 = vpop.permute.xlu0 %1712
    %1716 = vset.pattern.permute.xlu0 0
    %1717 = vperm.xlu0 %1716, %v1563
    %v1718 = vpop.permute.xlu0 %1717
    %1721 = vset.pattern.permute.xlu0 0
    %1722 = vperm.xlu0 %1721, %v1564
    %v1723 = vpop.permute.xlu0 %1722
    %v1725 = vmul.f32 %v1677, %v1688
    %v1726 = vmul.f32 %v1678, %v1693
    %v1727 = vmul.f32 %v1679, %v1698
    %v1728 = vmul.f32 %v1680, %v1703
    %v1729 = vmul.f32 %v1681, %v1708
    %v1730 = vmul.f32 %v1682, %v1713
    %v1731 = vmul.f32 %v1683, %v1718
    %v1732 = vmul.f32 %v1684, %v1723
    %1734 = vset.pattern.permute.xlu0 0
    %1735 = vperm.xlu0 %1734, %v1565
    %v1736 = vpop.permute.xlu0 %1735
    %1739 = vset.pattern.permute.xlu0 0
    %1740 = vperm.xlu0 %1739, %v1566
    %v1741 = vpop.permute.xlu0 %1740
    %1744 = vset.pattern.permute.xlu0 0
    %1745 = vperm.xlu0 %1744, %v1567
    %v1746 = vpop.permute.xlu0 %1745
    %1749 = vset.pattern.permute.xlu0 0
    %1750 = vperm.xlu0 %1749, %v1568
    %v1751 = vpop.permute.xlu0 %1750
    %1754 = vset.pattern.permute.xlu0 0
    %1755 = vperm.xlu0 %1754, %v1569
    %v1756 = vpop.permute.xlu0 %1755
    %1759 = vset.pattern.permute.xlu0 0
    %1760 = vperm.xlu0 %1759, %v1570
    %v1761 = vpop.permute.xlu0 %1760
    %1764 = vset.pattern.permute.xlu0 0
    %1765 = vperm.xlu0 %1764, %v1571
    %v1766 = vpop.permute.xlu0 %1765
    %1769 = vset.pattern.permute.xlu0 0
    %1770 = vperm.xlu0 %1769, %v1572
    %v1771 = vpop.permute.xlu0 %1770
    %v1773 = vadd.f32 %v1725, %v1736
    %v1774 = vadd.f32 %v1726, %v1741
    %v1775 = vadd.f32 %v1727, %v1746
    %v1776 = vadd.f32 %v1728, %v1751
    %v1777 = vadd.f32 %v1729, %v1756
    %v1778 = vadd.f32 %v1730, %v1761
    %v1779 = vadd.f32 %v1731, %v1766
    %v1780 = vadd.f32 %v1732, %v1771
    %v1781 = vxor.u32 %v1773, 2147483648
    %v1782 = vxor.u32 %v1774, 2147483648
    %v1783 = vxor.u32 %v1775, 2147483648
    %v1784 = vxor.u32 %v1776, 2147483648
    %v1785 = vxor.u32 %v1777, 2147483648
    %v1786 = vxor.u32 %v1778, 2147483648
    %v1787 = vxor.u32 %v1779, 2147483648
    %v1788 = vxor.u32 %v1780, 2147483648
    %v1789 = vmul.f32 %v1781, 1.442695
    %v1790 = vpow.pop %v1789
    %v1791 = vmul.f32 %v1782, 1.442695
    %v1792 = vpow.pop %v1791
    %v1793 = vmul.f32 %v1783, 1.442695
    %v1794 = vpow.pop %v1793
    %v1795 = vmul.f32 %v1784, 1.442695
    %v1796 = vpow.pop %v1795
    %v1797 = vmul.f32 %v1785, 1.442695
    %v1798 = vpow.pop %v1797
    %v1799 = vmul.f32 %v1786, 1.442695
    %v1800 = vpow.pop %v1799
    %v1801 = vmul.f32 %v1787, 1.442695
    %v1802 = vpow.pop %v1801
    %v1803 = vmul.f32 %v1788, 1.442695
    %v1804 = vpow.pop %v1803
    %v1805 = vadd.f32 %v1790, 1.0
    %v1806 = vadd.f32 %v1792, 1.0
    %v1807 = vadd.f32 %v1794, 1.0
    %v1808 = vadd.f32 %v1796, 1.0
    %v1809 = vadd.f32 %v1798, 1.0
    %v1810 = vadd.f32 %v1800, 1.0
    %v1811 = vadd.f32 %v1802, 1.0
    %v1812 = vadd.f32 %v1804, 1.0
    %v1813 = vrcp.pop %v1805
    %v1814 = vmul.f32 1.0, %v1813
    %v1815 = vrcp.pop %v1806
    %v1816 = vmul.f32 1.0, %v1815
    %v1817 = vrcp.pop %v1807
    %v1818 = vmul.f32 1.0, %v1817
    %v1819 = vrcp.pop %v1808
    %v1820 = vmul.f32 1.0, %v1819
    %v1821 = vrcp.pop %v1809
    %v1822 = vmul.f32 1.0, %v1821
    %v1823 = vrcp.pop %v1810
    %v1824 = vmul.f32 1.0, %v1823
    %v1825 = vrcp.pop %v1811
    %v1826 = vmul.f32 1.0, %v1825
    %v1827 = vrcp.pop %v1812
    %v1828 = vmul.f32 1.0, %v1827
    %1829 = vset.pattern.permute.xlu0 2
    %1830 = vperm.xlu0 %1829, %v1501
    %v1831 = vpop.permute.xlu0 %1830
    %1833 = vset.pattern.permute.xlu0 2
    %1834 = vperm.xlu0 %1833, %v1502
    %v1835 = vpop.permute.xlu0 %1834
    %1837 = vset.pattern.permute.xlu0 2
    %1838 = vperm.xlu0 %1837, %v1503
    %v1839 = vpop.permute.xlu0 %1838
    %1841 = vset.pattern.permute.xlu0 2
    %1842 = vperm.xlu0 %1841, %v1504
    %v1843 = vpop.permute.xlu0 %1842
    %1845 = vset.pattern.permute.xlu0 2
    %1846 = vperm.xlu0 %1845, %v1505
    %v1847 = vpop.permute.xlu0 %1846
    %1849 = vset.pattern.permute.xlu0 2
    %1850 = vperm.xlu0 %1849, %v1506
    %v1851 = vpop.permute.xlu0 %1850
    %1853 = vset.pattern.permute.xlu0 2
    %1854 = vperm.xlu0 %1853, %v1507
    %v1855 = vpop.permute.xlu0 %1854
    %1857 = vset.pattern.permute.xlu0 2
    %1858 = vperm.xlu0 %1857, %v1508
    %v1859 = vpop.permute.xlu0 %1858
    %v1861 = vsub.f32 %v1215, %v1831
    %v1862 = vsub.f32 %v1216, %v1835
    %v1863 = vsub.f32 %v1217, %v1839
    %v1864 = vsub.f32 %v1218, %v1843
    %v1865 = vsub.f32 %v1219, %v1847
    %v1866 = vsub.f32 %v1220, %v1851
    %v1867 = vsub.f32 %v1221, %v1855
    %v1868 = vsub.f32 %v1222, %v1859
    %1869 = vset.pattern.permute.xlu0 3
    %1870 = vperm.xlu0 %1869, %v1629
    %v1871 = vpop.permute.xlu0 %1870
    %1873 = vset.pattern.permute.xlu0 3
    %1874 = vperm.xlu0 %1873, %v1630
    %v1875 = vpop.permute.xlu0 %1874
    %1877 = vset.pattern.permute.xlu0 3
    %1878 = vperm.xlu0 %1877, %v1631
    %v1879 = vpop.permute.xlu0 %1878
    %1881 = vset.pattern.permute.xlu0 3
    %1882 = vperm.xlu0 %1881, %v1632
    %v1883 = vpop.permute.xlu0 %1882
    %1885 = vset.pattern.permute.xlu0 3
    %1886 = vperm.xlu0 %1885, %v1633
    %v1887 = vpop.permute.xlu0 %1886
    %1889 = vset.pattern.permute.xlu0 3
    %1890 = vperm.xlu0 %1889, %v1634
    %v1891 = vpop.permute.xlu0 %1890
    %1893 = vset.pattern.permute.xlu0 3
    %1894 = vperm.xlu0 %1893, %v1635
    %v1895 = vpop.permute.xlu0 %1894
    %1897 = vset.pattern.permute.xlu0 3
    %1898 = vperm.xlu0 %1897, %v1636
    %v1899 = vpop.permute.xlu0 %1898
    %v1901 = vmul.f32 %v1861, %v1871
    %v1902 = vmul.f32 %v1862, %v1875
    %v1903 = vmul.f32 %v1863, %v1879
    %v1904 = vmul.f32 %v1864, %v1883
    %v1905 = vmul.f32 %v1865, %v1887
    %v1906 = vmul.f32 %v1866, %v1891
    %v1907 = vmul.f32 %v1867, %v1895
    %v1908 = vmul.f32 %v1868, %v1899
    %v1909 = vmul.f32 %v1901, %v1688
    %v1910 = vmul.f32 %v1902, %v1693
    %v1911 = vmul.f32 %v1903, %v1698
    %v1912 = vmul.f32 %v1904, %v1703
    %v1913 = vmul.f32 %v1905, %v1708
    %v1914 = vmul.f32 %v1906, %v1713
    %v1915 = vmul.f32 %v1907, %v1718
    %v1916 = vmul.f32 %v1908, %v1723
    %v1917 = vadd.f32 %v1909, %v1736
    %v1918 = vadd.f32 %v1910, %v1741
    %v1919 = vadd.f32 %v1911, %v1746
    %v1920 = vadd.f32 %v1912, %v1751
    %v1921 = vadd.f32 %v1913, %v1756
    %v1922 = vadd.f32 %v1914, %v1761
    %v1923 = vadd.f32 %v1915, %v1766
    %v1924 = vadd.f32 %v1916, %v1771
    %v1925 = vxor.u32 %v1917, 2147483648
    %v1926 = vxor.u32 %v1918, 2147483648
    %v1927 = vxor.u32 %v1919, 2147483648
    %v1928 = vxor.u32 %v1920, 2147483648
    %v1929 = vxor.u32 %v1921, 2147483648
    %v1930 = vxor.u32 %v1922, 2147483648
    %v1931 = vxor.u32 %v1923, 2147483648
    %v1932 = vxor.u32 %v1924, 2147483648
    %v1933 = vmul.f32 %v1925, 1.442695
    %v1934 = vpow.pop %v1933
    %v1935 = vmul.f32 %v1926, 1.442695
    %v1936 = vpow.pop %v1935
    %v1937 = vmul.f32 %v1927, 1.442695
    %v1938 = vpow.pop %v1937
    %v1939 = vmul.f32 %v1928, 1.442695
    %v1940 = vpow.pop %v1939
    %v1941 = vmul.f32 %v1929, 1.442695
    %v1942 = vpow.pop %v1941
    %v1943 = vmul.f32 %v1930, 1.442695
    %v1944 = vpow.pop %v1943
    %v1945 = vmul.f32 %v1931, 1.442695
    %v1946 = vpow.pop %v1945
    %v1947 = vmul.f32 %v1932, 1.442695
    %v1948 = vpow.pop %v1947
    %v1949 = vadd.f32 %v1934, 1.0
    %v1950 = vadd.f32 %v1936, 1.0
    %v1951 = vadd.f32 %v1938, 1.0
    %v1952 = vadd.f32 %v1940, 1.0
    %v1953 = vadd.f32 %v1942, 1.0
    %v1954 = vadd.f32 %v1944, 1.0
    %v1955 = vadd.f32 %v1946, 1.0
    %v1956 = vadd.f32 %v1948, 1.0
    %v1957 = vrcp.pop %v1949
    %v1958 = vmul.f32 1.0, %v1957
    %v1959 = vrcp.pop %v1950
    %v1960 = vmul.f32 1.0, %v1959
    %v1961 = vrcp.pop %v1951
    %v1962 = vmul.f32 1.0, %v1961
    %v1963 = vrcp.pop %v1952
    %v1964 = vmul.f32 1.0, %v1963
    %v1965 = vrcp.pop %v1953
    %v1966 = vmul.f32 1.0, %v1965
    %v1967 = vrcp.pop %v1954
    %v1968 = vmul.f32 1.0, %v1967
    %v1969 = vrcp.pop %v1955
    %v1970 = vmul.f32 1.0, %v1969
    %v1971 = vrcp.pop %v1956
    %v1972 = vmul.f32 1.0, %v1971
    %v1973 = vld [vmem:[%s2] sm:$0xff]
    %v1974 = vld [vmem:[%s2 + $0x8] sm:$0xff]
    %v1975 = vld [vmem:[%s2 + $0x10] sm:$0xff]
    %v1976 = vld [vmem:[%s2 + $0x18] sm:$0xff]
    %v1978 = vsel %vm1223, %v1814, 0
    %v1981 = vsel %vm1223, %v1816, 0
    %v1984 = vsel %vm1223, %v1818, 0
    %v1987 = vsel %vm1223, %v1820, 0
    %v1990 = vsel %vm1223, %v1822, 0
    %v1993 = vsel %vm1223, %v1824, 0
    %v1996 = vsel %vm1223, %v1826, 0
    %v1999 = vsel %vm1223, %v1828, 0
    %2001 = vmatprep.subr.mxu0 %v1974
    %2002 = vmatpush1.msra.mxu0 %v1973
    %2003 = vmatprep.subr.mxu0 %v1976
    %2004 = vmatpush1.msra.mxu0 %v1975
    %2005 = vmatprep.subr.mxu0 0.0
    %2006 = vmatpush1.msra.mxu0 0.0
    %2007 = vmatprep.subr.mxu0 0.0
    %2008 = vmatpush1.msra.mxu0 0.0
    %2009 = vmatprep.subr.mxu0 0.0
    %2010 = vmatpush1.msra.mxu0 0.0
    %2011 = vmatprep.subr.mxu0 0.0
    %2012 = vmatpush1.msra.mxu0 0.0
    %2013 = vmatprep.subr.mxu0 0.0
    %2014 = vmatpush1.msra.mxu0 0.0
    %2015 = vmatprep.subr.mxu0 0.0
    %2016 = vmatpush1.msra.mxu0 0.0
    %2017 = vmatprep.subr.mxu0 0.0
    %2018 = vmatpush1.msra.mxu0 0.0
    %2019 = vmatprep.subr.mxu0 0.0
    %2020 = vmatpush1.msra.mxu0 0.0
    %2021 = vmatprep.subr.mxu0 0.0
    %2022 = vmatpush1.msra.mxu0 0.0
    %2023 = vmatprep.subr.mxu0 0.0
    %2024 = vmatpush1.msra.mxu0 0.0
    %2025 = vmatprep.subr.mxu0 0.0
    %2026 = vmatpush1.msra.mxu0 0.0
    %2027 = vmatprep.subr.mxu0 0.0
    %2028 = vmatpush1.msra.mxu0 0.0
    %2029 = vmatprep.subr.mxu0 0.0
    %2030 = vmatpush1.msra.mxu0 0.0
    %2031 = vmatprep.subr.mxu0 0.0
    %2032 = vmatpush1.msra.mxu0 0.0
    %2033 = vmatprep.subr.mxu0 0.0
    %2034 = vmatpush1.msra.mxu0 0.0
    %2035 = vmatprep.subr.mxu0 0.0
    %2036 = vmatpush1.msra.mxu0 0.0
    %2037 = vmatprep.subr.mxu0 0.0
    %2038 = vmatpush1.msra.mxu0 0.0
    %2039 = vmatprep.subr.mxu0 0.0
    %2040 = vmatpush1.msra.mxu0 0.0
    %2041 = vmatprep.subr.mxu0 0.0
    %2042 = vmatpush1.msra.mxu0 0.0
    %2043 = vmatprep.subr.mxu0 0.0
    %2044 = vmatpush1.msra.mxu0 0.0
    %2045 = vmatprep.subr.mxu0 0.0
    %2046 = vmatpush1.msra.mxu0 0.0
    %2047 = vmatprep.subr.mxu0 0.0
    %2048 = vmatpush1.msra.mxu0 0.0
    %2049 = vmatprep.subr.mxu0 0.0
    %2050 = vmatpush1.msra.mxu0 0.0
    %2051 = vmatprep.subr.mxu0 0.0
    %2052 = vmatpush1.msra.mxu0 0.0
    %2053 = vmatprep.subr.mxu0 0.0
    %2054 = vmatpush1.msra.mxu0 0.0
    %2055 = vmatprep.subr.mxu0 0.0
    %2056 = vmatpush1.msra.mxu0 0.0
    %2057 = vmatprep.subr.mxu0 0.0
    %2058 = vmatpush1.msra.mxu0 0.0
    %2059 = vmatprep.subr.mxu0 0.0
    %2060 = vmatpush1.msra.mxu0 0.0
    %2061 = vmatprep.subr.mxu0 0.0
    %2062 = vmatpush1.msra.mxu0 0.0
    %2063 = vmatprep.subr.mxu0 0.0
    %2064 = vmatpush1.msra.mxu0 0.0
    %2065 = vmatprep.mubr.f32.mxu0 0.0
    %2066 = vmatmul.mubr.f32.gmra.mrb[0].mxu0 %v1978
    %v2067 = vpop.f32.mrb[0].mxu0
    %v2068 = vadd.f32 0.0, %v2067
    %v2069 = vpop.f32.mrb[0].mxu0
    %v2070 = vadd.f32 0.0, %v2069
    %2071 = vmatprep.mubr.f32.mxu0 0.0
    %2072 = vmatmul.mubr.f32.gmra.mrb[0].mxu0 %v1981
    %v2073 = vpop.f32.mrb[0].mxu0
    %v2074 = vadd.f32 0.0, %v2073
    %v2075 = vpop.f32.mrb[0].mxu0
    %v2076 = vadd.f32 0.0, %v2075
    %2077 = vmatprep.mubr.f32.mxu0 0.0
    %2078 = vmatmul.mubr.f32.gmra.mrb[0].mxu0 %v1984
    %v2079 = vpop.f32.mrb[0].mxu0
    %v2080 = vadd.f32 0.0, %v2079
    %v2081 = vpop.f32.mrb[0].mxu0
    %v2082 = vadd.f32 0.0, %v2081
    %2083 = vmatprep.mubr.f32.mxu0 0.0
    %2084 = vmatmul.mubr.f32.gmra.mrb[0].mxu0 %v1987
    %v2085 = vpop.f32.mrb[0].mxu0
    %v2086 = vadd.f32 0.0, %v2085
    %v2087 = vpop.f32.mrb[0].mxu0
    %v2088 = vadd.f32 0.0, %v2087
    %2089 = vmatprep.mubr.f32.mxu0 0.0
    %2090 = vmatmul.mubr.f32.gmra.mrb[0].mxu0 %v1990
    %v2091 = vpop.f32.mrb[0].mxu0
    %v2092 = vadd.f32 0.0, %v2091
    %v2093 = vpop.f32.mrb[0].mxu0
    %v2094 = vadd.f32 0.0, %v2093
    %2095 = vmatprep.mubr.f32.mxu0 0.0
    %2096 = vmatmul.mubr.f32.gmra.mrb[0].mxu0 %v1993
    %v2097 = vpop.f32.mrb[0].mxu0
    %v2098 = vadd.f32 0.0, %v2097
    %v2099 = vpop.f32.mrb[0].mxu0
    %v2100 = vadd.f32 0.0, %v2099
    %2101 = vmatprep.mubr.f32.mxu0 0.0
    %2102 = vmatmul.mubr.f32.gmra.mrb[0].mxu0 %v1996
    %v2103 = vpop.f32.mrb[0].mxu0
    %v2104 = vadd.f32 0.0, %v2103
    %v2105 = vpop.f32.mrb[0].mxu0
    %v2106 = vadd.f32 0.0, %v2105
    %2107 = vmatprep.mubr.f32.mxu0 0.0
    %2108 = vmatmul.mubr.f32.gmra.mrb[0].mxu0 %v1999
    %v2109 = vpop.f32.mrb[0].mxu0
    %v2110 = vadd.f32 0.0, %v2109
    %v2111 = vpop.f32.mrb[0].mxu0
    %v2112 = vadd.f32 0.0, %v2111
    %2113 = vdwg.mxu0
    %v2114 = vld [vmem:[%s3] sm:$0xff]
    %v2115 = vld [vmem:[%s3 + $0x8] sm:$0xff]
    %v2116 = vld [vmem:[%s3 + $0x10] sm:$0xff]
    %v2117 = vld [vmem:[%s3 + $0x18] sm:$0xff]
    %v2119 = vsel %vm1223, %v1958, 0
    %v2122 = vsel %vm1223, %v1960, 0
    %v2125 = vsel %vm1223, %v1962, 0
    %v2128 = vsel %vm1223, %v1964, 0
    %v2131 = vsel %vm1223, %v1966, 0
    %v2134 = vsel %vm1223, %v1968, 0
    %v2137 = vsel %vm1223, %v1970, 0
    %v2140 = vsel %vm1223, %v1972, 0
    %2142 = vmatprep.subr.mxu0 %v2115
    %2143 = vmatpush1.msra.mxu0 %v2114
    %2144 = vmatprep.subr.mxu0 %v2117
    %2145 = vmatpush1.msra.mxu0 %v2116
    %2146 = vmatprep.subr.mxu0 0.0
    %2147 = vmatpush1.msra.mxu0 0.0
    %2148 = vmatprep.subr.mxu0 0.0
    %2149 = vmatpush1.msra.mxu0 0.0
    %2150 = vmatprep.subr.mxu0 0.0
    %2151 = vmatpush1.msra.mxu0 0.0
    %2152 = vmatprep.subr.mxu0 0.0
    %2153 = vmatpush1.msra.mxu0 0.0
    %2154 = vmatprep.subr.mxu0 0.0
    %2155 = vmatpush1.msra.mxu0 0.0
    %2156 = vmatprep.subr.mxu0 0.0
    %2157 = vmatpush1.msra.mxu0 0.0
    %2158 = vmatprep.subr.mxu0 0.0
    %2159 = vmatpush1.msra.mxu0 0.0
    %2160 = vmatprep.subr.mxu0 0.0
    %2161 = vmatpush1.msra.mxu0 0.0
    %2162 = vmatprep.subr.mxu0 0.0
    %2163 = vmatpush1.msra.mxu0 0.0
    %2164 = vmatprep.subr.mxu0 0.0
    %2165 = vmatpush1.msra.mxu0 0.0
    %2166 = vmatprep.subr.mxu0 0.0
    %2167 = vmatpush1.msra.mxu0 0.0
    %2168 = vmatprep.subr.mxu0 0.0
    %2169 = vmatpush1.msra.mxu0 0.0
    %2170 = vmatprep.subr.mxu0 0.0
    %2171 = vmatpush1.msra.mxu0 0.0
    %2172 = vmatprep.subr.mxu0 0.0
    %2173 = vmatpush1.msra.mxu0 0.0
    %2174 = vmatprep.subr.mxu0 0.0
    %2175 = vmatpush1.msra.mxu0 0.0
    %2176 = vmatprep.subr.mxu0 0.0
    %2177 = vmatpush1.msra.mxu0 0.0
    %2178 = vmatprep.subr.mxu0 0.0
    %2179 = vmatpush1.msra.mxu0 0.0
    %2180 = vmatprep.subr.mxu0 0.0
    %2181 = vmatpush1.msra.mxu0 0.0
    %2182 = vmatprep.subr.mxu0 0.0
    %2183 = vmatpush1.msra.mxu0 0.0
    %2184 = vmatprep.subr.mxu0 0.0
    %2185 = vmatpush1.msra.mxu0 0.0
    %2186 = vmatprep.subr.mxu0 0.0
    %2187 = vmatpush1.msra.mxu0 0.0
    %2188 = vmatprep.subr.mxu0 0.0
    %2189 = vmatpush1.msra.mxu0 0.0
    %2190 = vmatprep.subr.mxu0 0.0
    %2191 = vmatpush1.msra.mxu0 0.0
    %2192 = vmatprep.subr.mxu0 0.0
    %2193 = vmatpush1.msra.mxu0 0.0
    %2194 = vmatprep.subr.mxu0 0.0
    %2195 = vmatpush1.msra.mxu0 0.0
    %2196 = vmatprep.subr.mxu0 0.0
    %2197 = vmatpush1.msra.mxu0 0.0
    %2198 = vmatprep.subr.mxu0 0.0
    %2199 = vmatpush1.msra.mxu0 0.0
    %2200 = vmatprep.subr.mxu0 0.0
    %2201 = vmatpush1.msra.mxu0 0.0
    %2202 = vmatprep.subr.mxu0 0.0
    %2203 = vmatpush1.msra.mxu0 0.0
    %2204 = vmatprep.subr.mxu0 0.0
    %2205 = vmatpush1.msra.mxu0 0.0
    %2206 = vmatprep.mubr.f32.mxu0 0.0
    %2207 = vmatmul.mubr.f32.gmra.mrb[0].mxu0 %v2119
    %v2208 = vpop.f32.mrb[0].mxu0
    %v2209 = vadd.f32 0.0, %v2208
    %v2210 = vpop.f32.mrb[0].mxu0
    %v2211 = vadd.f32 0.0, %v2210
    %2212 = vmatprep.mubr.f32.mxu0 0.0
    %2213 = vmatmul.mubr.f32.gmra.mrb[0].mxu0 %v2122
    %v2214 = vpop.f32.mrb[0].mxu0
    %v2215 = vadd.f32 0.0, %v2214
    %v2216 = vpop.f32.mrb[0].mxu0
    %v2217 = vadd.f32 0.0, %v2216
    %2218 = vmatprep.mubr.f32.mxu0 0.0
    %2219 = vmatmul.mubr.f32.gmra.mrb[0].mxu0 %v2125
    %v2220 = vpop.f32.mrb[0].mxu0
    %v2221 = vadd.f32 0.0, %v2220
    %v2222 = vpop.f32.mrb[0].mxu0
    %v2223 = vadd.f32 0.0, %v2222
    %2224 = vmatprep.mubr.f32.mxu0 0.0
    %2225 = vmatmul.mubr.f32.gmra.mrb[0].mxu0 %v2128
    %v2226 = vpop.f32.mrb[0].mxu0
    %v2227 = vadd.f32 0.0, %v2226
    %v2228 = vpop.f32.mrb[0].mxu0
    %v2229 = vadd.f32 0.0, %v2228
    %2230 = vmatprep.mubr.f32.mxu0 0.0
    %2231 = vmatmul.mubr.f32.gmra.mrb[0].mxu0 %v2131
    %v2232 = vpop.f32.mrb[0].mxu0
    %v2233 = vadd.f32 0.0, %v2232
    %v2234 = vpop.f32.mrb[0].mxu0
    %v2235 = vadd.f32 0.0, %v2234
    %2236 = vmatprep.mubr.f32.mxu0 0.0
    %2237 = vmatmul.mubr.f32.gmra.mrb[0].mxu0 %v2134
    %v2238 = vpop.f32.mrb[0].mxu0
    %v2239 = vadd.f32 0.0, %v2238
    %v2240 = vpop.f32.mrb[0].mxu0
    %v2241 = vadd.f32 0.0, %v2240
    %2242 = vmatprep.mubr.f32.mxu0 0.0
    %2243 = vmatmul.mubr.f32.gmra.mrb[0].mxu0 %v2137
    %v2244 = vpop.f32.mrb[0].mxu0
    %v2245 = vadd.f32 0.0, %v2244
    %v2246 = vpop.f32.mrb[0].mxu0
    %v2247 = vadd.f32 0.0, %v2246
    %2248 = vmatprep.mubr.f32.mxu0 0.0
    %2249 = vmatmul.mubr.f32.gmra.mrb[0].mxu0 %v2140
    %v2250 = vpop.f32.mrb[0].mxu0
    %v2251 = vadd.f32 0.0, %v2250
    %v2252 = vpop.f32.mrb[0].mxu0
    %v2253 = vadd.f32 0.0, %v2252
    %2254 = vdwg.mxu0
    %v2255 = vmul.f32 %v2068, %v2209
    %v2256 = vmul.f32 %v2070, %v2211
    %v2257 = vmul.f32 %v2074, %v2215
    %v2258 = vmul.f32 %v2076, %v2217
    %v2259 = vmul.f32 %v2080, %v2221
    %v2260 = vmul.f32 %v2082, %v2223
    %v2261 = vmul.f32 %v2086, %v2227
    %v2262 = vmul.f32 %v2088, %v2229
    %v2263 = vmul.f32 %v2092, %v2233
    %v2264 = vmul.f32 %v2094, %v2235
    %v2265 = vmul.f32 %v2098, %v2239
    %v2266 = vmul.f32 %v2100, %v2241
    %v2267 = vmul.f32 %v2104, %v2245
    %v2268 = vmul.f32 %v2106, %v2247
    %v2269 = vmul.f32 %v2110, %v2251
    %v2270 = vmul.f32 %v2112, %v2253
    %v2271 = vmul.f32 %v30, %v2255
    %v2272 = vmul.f32 %v31, %v2256
    %v2273 = vmul.f32 %v32, %v2257
    %v2274 = vmul.f32 %v33, %v2258
    %v2275 = vmul.f32 %v34, %v2259
    %v2276 = vmul.f32 %v35, %v2260
    %v2277 = vmul.f32 %v36, %v2261
    %v2278 = vmul.f32 %v37, %v2262
    %v2279 = vmul.f32 %v38, %v2263
    %v2280 = vmul.f32 %v39, %v2264
    %v2281 = vmul.f32 %v40, %v2265
    %v2282 = vmul.f32 %v41, %v2266
    %v2283 = vmul.f32 %v42, %v2267
    %v2284 = vmul.f32 %v43, %v2268
    %v2285 = vmul.f32 %v44, %v2269
    %v2286 = vmul.f32 %v45, %v2270
    %2287 = vst [vmem:[#allocation2] sm:$0xff] %v2271
    %2288 = vst [vmem:[#allocation2 + $0x8] sm:$0xff] %v2272
    %2289 = vst [vmem:[#allocation2 + $0x10] sm:$0xff] %v2273
    %2290 = vst [vmem:[#allocation2 + $0x18] sm:$0xff] %v2274
    %2291 = vst [vmem:[#allocation2 + $0x20] sm:$0xff] %v2275
    %2292 = vst [vmem:[#allocation2 + $0x28] sm:$0xff] %v2276
    %2293 = vst [vmem:[#allocation2 + $0x30] sm:$0xff] %v2277
    %2294 = vst [vmem:[#allocation2 + $0x38] sm:$0xff] %v2278
    %2295 = vst [vmem:[#allocation2 + $0x40] sm:$0xff] %v2279
    %2296 = vst [vmem:[#allocation2 + $0x48] sm:$0xff] %v2280
    %2297 = vst [vmem:[#allocation2 + $0x50] sm:$0xff] %v2281
    %2298 = vst [vmem:[#allocation2 + $0x58] sm:$0xff] %v2282
    %2299 = vst [vmem:[#allocation2 + $0x60] sm:$0xff] %v2283
    %2300 = vst [vmem:[#allocation2 + $0x68] sm:$0xff] %v2284
    %2301 = vst [vmem:[#allocation2 + $0x70] sm:$0xff] %v2285
    %2302 = vst [vmem:[#allocation2 + $0x78] sm:$0xff] %v2286
    // Predicated region
    $region34: #{tpu_custom_call.1} parent=1 // pred_check
      _
    $region35: #{tpu_custom_call.1} parent=1 // pred_check_branch
      %2304 = sbr.rel (0) target = $region37
    $region36: #{tpu_custom_call.1} parent=1 // pred_region
      %s2306 = ssub.s32 2048, 2048
      %2307 = vsyncadd [#allocation3], %s2306
      %s2308 = sshll.u32 [#allocation2], 4
      %s2309 = int_to_ptr.vmem [resolvable:$true] %s2308
      %2314 = dma.vmem_to_hbm [thread:$0]  %s2309, 2048, %s8, [#allocation3], 256, 256, 16
    $region37: #{tpu_custom_call.1} parent=1 // pred_fallthru
      _
    // Predicated region
    $region38: #{tpu_custom_call.1} parent=1 // pred_check
      _
    $region39: #{tpu_custom_call.1} parent=1 // pred_check_branch
      %2316 = sbr.rel (0) target = $region41
    $region40: #{tpu_custom_call.1} parent=1 // pred_region
      %2317 = dma.done [#allocation3], 2048
    $region41: #{tpu_custom_call.1} parent=1 // pred_fallthru
      _
    %2318 = vsyncpa [#allocation3], 1

</llo_original>
